<compile_context>
chip_gen: v6e
topology: v6e:2x2x1
jax: 0.10.0
libtpu: 0.0.40
codegen_flags: <defaults>
</compile_context>

<pallas_src>
import functools

import jax
import jax.numpy as jnp
from jax import lax
from jax.experimental import pallas as pl
from jax.experimental.pallas import tpu as pltpu

# chunk i -> (reverse along H, reverse along W):
#   chunk 0: TopLeftPool, 1: TopRightPool, 2: BottomLeftPool, 3: BottomRightPool
POOL_DIRS = ((True, True), (True, False), (False, True), (False, False))

_NEG = -1e30  # "never selected" guide offset (guides are uniform in [0, 1))


def _num_steps(n):
    return max(0, (n - 1).bit_length())   # log-step scan steps: d = 1, 2, 4, ... < n


# --------------------------------------------------------------------------------------
# kernel
# --------------------------------------------------------------------------------------
def _g2conv_kernel(x_ref, g_ref, m_ref, dir_ref,
                   w1_ref, b1_ref, w2_ref, b2_ref, o_ref, *, B, C, H, W, K):
    S = H * W
    R = B * C
    nw = _num_steps(W)
    nh = _num_steps(H)
    pad = K // 2

    x = x_ref[...]                          # (R, S) lane-dense tile, B images
    g = g_ref[...]                          # same random guide for both layers

    # Precomputed (1, S) mask rows (host-built; no in-kernel iota / int compares).
    def mrow(idx):
        return m_ref[idx:idx + 1, :]
    wf = [mrow(k) for k in range(nw)]                       # W forward, additive 0/-1e30
    wr = [mrow(nw + k) for k in range(nw)]                  # W reverse
    hf = [mrow(2 * nw + k) for k in range(nh)]              # H forward
    hr = [mrow(2 * nw + nh + k) for k in range(nh)]         # H reverse
    tap = [mrow(2 * (nw + nh) + t) for t in range(K * K)]   # conv taps, multiplicative 1/0

    # Per-row scan directions: broadcast ONCE (jax does not CSE broadcast_in_dim).
    rev_w = jnp.broadcast_to(dir_ref[:, 0:1] != 0, (R, S))
    rev_h = jnp.broadcast_to(dir_ref[:, 1:2] != 0, (R, S))

    def roll(a, shift):
        # jnp.roll semantics (out[s] = a[s - shift]); pltpu.roll wants non-negative shifts.
        shift = shift % S
        return pltpu.roll(a, shift, axis=1) if shift else a

    def scan(gv, vv, step0, n_steps, step_masks):
        """Directional guided arg-max prefix scan (log-step / Hillis-Steele).

        step0 = +stride (forward) or -stride (reverse).  step_masks[k] is an additive
        (1, S) mask that kills candidates crossing the image / directional boundary at
        offset 2^k*|step0|.  Ties keep the later-in-scan-order element (matches reference).
        """
        for k in range(n_steps):
            off = step0 * (1 << k)
            gs = roll(gv, off) + step_masks[k]
            vs = roll(vv, off)
            take = gs > gv
            gv = jnp.where(take, gs, gv)
            vv = jnp.where(take, vs, vv)
        return gv, vv

    def pool4(v):
        """Guided 4-corner pooling of (R, S) values (direction chosen per row)."""
        gFw, vFw = scan(g, v, +1, nw, wf)
        gRw, vRw = scan(g, v, -1, nw, wr)
        g1 = jnp.where(rev_w, gRw, gFw)
        v1 = jnp.where(rev_w, vRw, vFw)
        _, vFh = scan(g1, v1, +W, nh, hf)
        _, vRh = scan(g1, v1, -W, nh, hr)
        return jnp.where(rev_h, vRh, vFh)

    def conv(p, w_ref_, b_ref_):
        """'same' KxK conv: accumulate K partial matmuls (Cout, K*C)@(K*C, S) per kernel row
        (never materializes the full (K*K*C, S) im2col slab)."""
        accs = [None] * B
        for kh in range(K):
            dy = kh - pad
            shifted = []
            for kw in range(K):
                dx = kw - pad
                off = dy * W + dx
                t = kh * K + kw
                if off == 0:
                    shifted.append(p)                       # center tap: no shift, all valid
                else:
                    shifted.append(roll(p, -off) * tap[t])  # zero outside the image
            wk = w_ref_[:, kh * K * C:(kh + 1) * K * C]     # (Cout, K*C), (kh, kw, cin) layout
            for b in range(B):
                patch = jnp.concatenate(
                    [s[b * C:(b + 1) * C, :] for s in shifted], axis=0)   # (K*C, S)
                part = jnp.dot(wk, patch, preferred_element_type=jnp.float32)
                accs[b] = part if accs[b] is None else accs[b] + part
        bias = b_ref_[...]                                  # (Cout, 1)
        outs = [a + bias for a in accs]
        return outs[0] if B == 1 else jnp.concatenate(outs, axis=0)

    # layer 1
    y1 = conv(pool4(x), w1_ref, b1_ref)
    # layer 2: same random guide; recompute the cheap guide compares instead of keeping
    # 16 take-masks live across the conv1 matmul (avoids vreg spills).
    o_ref[...] = conv(pool4(y1), w2_ref, b2_ref)


# --------------------------------------------------------------------------------------
# wrapper
# --------------------------------------------------------------------------------------
def _weights_to_matrix(w_oihw, b):
    Cout, Cin, K, _ = w_oihw.shape
    wm = jnp.transpose(w_oihw, (0, 2, 3, 1)).reshape(Cout, K * K * Cin).astype(jnp.float32)
    return wm, b.reshape(Cout, 1).astype(jnp.float32)


def _build_masks(H, W, K):
    """(n_masks, H*W) f32: scan-validity masks (additive 0/-1e30) then conv-tap masks (1/0)."""
    S = H * W
    s = jnp.arange(S, dtype=jnp.int32)
    j = s % W
    i = s // W
    rows = []
    for k in range(_num_steps(W)):
        d = 1 << k
        rows.append(jnp.where(j >= d, 0.0, _NEG))            # W forward
    for k in range(_num_steps(W)):
        d = 1 << k
        rows.append(jnp.where(j < W - d, 0.0, _NEG))          # W reverse
    for k in range(_num_steps(H)):
        d = 1 << k
        rows.append(jnp.where(i >= d, 0.0, _NEG))              # H forward
    for k in range(_num_steps(H)):
        d = 1 << k
        rows.append(jnp.where(i < H - d, 0.0, _NEG))           # H reverse
    pad = K // 2
    for kh in range(K):
        dy = kh - pad
        for kw in range(K):
            dx = kw - pad
            valid = (i + dy >= 0) & (i + dy < H) & (j + dx >= 0) & (j + dx < W)
            rows.append(jnp.where(valid, 1.0, 0.0))
    return jnp.stack(rows, axis=0).astype(jnp.float32)


def _build_dirs(C, B):
    """(B*C, 2) int32: per-row (reverse-along-W, reverse-along-H) flags."""
    chunk = jnp.arange(C, dtype=jnp.int32) // (C // 4)
    rev_w = (chunk % 2 == 0).astype(jnp.int32)                # chunks 0, 2 scan right->left
    rev_h = (chunk < 2).astype(jnp.int32)                     # chunks 0, 1 scan bottom->top
    d = jnp.stack([rev_w, rev_h], axis=1)
    return jnp.tile(d, (B, 1))


def _choose_batch_block(n):
    # Biggest block that amortizes the ~0.35 us/step overhead while keeping >=2 grid steps
    # (so the BlockSpec pipeline has something to prefetch and both v7x cores get work).
    for b in (8, 4, 2):
        if n % b == 0 and n // b >= 2:
            return b
    return 1


@jax.jit
def g2conv2d4_random_forward(x, guide, params):
    """G2Conv2d4_random.forward: x, guide in NCHW; both GConv2d4 layers fused in one kernel."""
    N, C, H, W = x.shape
    Cout, Cin, K, Kw = params["w1"].shape
    assert Cin == C and Cout == C and C % 4 == 0 and K == Kw and K % 2 == 1
    S = H * W
    B = _choose_batch_block(N)
    steps = N // B
    R = B * C

    x2 = x.reshape(N * C, S).astype(jnp.float32)
    g2 = guide.reshape(N * C, S).astype(jnp.float32)
    w1m, b1 = _weights_to_matrix(params["w1"], params["b1"])
    w2m, b2 = _weights_to_matrix(params["w2"], params["b2"])
    masks = _build_masks(H, W, K)
    dirs = _build_dirs(C, B)

    kernel = functools.partial(_g2conv_kernel, B=B, C=C, H=H, W=W, K=K)
    # NOTE: for production-scale C*H*W (v7x: 64 MiB physical / 32 MiB scoped VMEM) this would
    # additionally need spatial tiling with a K//2 halo + an explicit vmem_limit_bytes;
    # unnecessary at these sizes since the im2col slab is never materialized.
    out = pl.pallas_call(
        kernel,
        out_shape=jax.ShapeDtypeStruct((N * C, S), jnp.float32),
        grid=(steps,),
        in_specs=[
            pl.BlockSpec((R, S), lambda n: (n, 0)),                  # x (B images per step)
            pl.BlockSpec((R, S), lambda n: (n, 0)),                  # guide
            pl.BlockSpec(masks.shape, lambda n: (0, 0)),             # precomputed masks
            pl.BlockSpec((R, 2), lambda n: (0, 0)),                  # per-row directions
            pl.BlockSpec((Cout, K * K * C), lambda n: (0, 0)),       # w1 (im2col layout)
            pl.BlockSpec((Cout, 1), lambda n: (0, 0)),               # b1
            pl.BlockSpec((Cout, K * K * C), lambda n: (0, 0)),       # w2
            pl.BlockSpec((Cout, 1), lambda n: (0, 0)),               # b2
        ],
        out_specs=pl.BlockSpec((R, S), lambda n: (n, 0)),
        compiler_params=pltpu.CompilerParams(dimension_semantics=("parallel",)),
    )(x2, g2, masks, dirs, w1m, b1, w2m, b2)
    return out.reshape(N, C, H, W)


# --------------------------- plain-JAX reference (for checking) --------------------------
def _guided_scan(g, v, axis, reverse):
    n = g.shape[axis]
    order = list(range(n))
    if reverse:
        order = order[::-1]
    out_g = [None] * n
    out_v = [None] * n
    run_g = None
    run_v = None
    for i in order:
        gi = lax.index_in_dim(g, i, axis, keepdims=True)
        vi = lax.index_in_dim(v, i, axis, keepdims=True)
        if run_g is None:
            run_g, run_v = gi, vi
        else:
            take = gi >= run_g
            run_g = jnp.where(take, gi, run_g)
            run_v = jnp.where(take, vi, run_v)
        out_g[i] = run_g
        out_v[i] = run_v
    return jnp.concatenate(out_g, axis=axis), jnp.concatenate(out_v, axis=axis)


def _gconv2d4_reference(x, guide, w, b):
    N, C, H, W = x.shape
    Cq = C // 4
    chunks = []
    for q, (rev_h, rev_w) in enumerate(POOL_DIRS):
        xv = x[:, q * Cq:(q + 1) * Cq]
        gv = guide[:, q * Cq:(q + 1) * Cq]
        g1, v1 = _guided_scan(gv, xv, axis=3, reverse=rev_w)
        _, v2 = _guided_scan(g1, v1, axis=2, reverse=rev_h)
        chunks.append(v2)
    pooled = jnp.concatenate(chunks, axis=1)
    pad = w.shape[2] // 2
    out = lax.conv_general_dilated(
        pooled, w, window_strides=(1, 1),
        padding=((pad, pad), (pad, pad)),
        dimension_numbers=("NCHW", "OIHW", "NCHW"))
    return out + b.reshape(1, -1, 1, 1)


if __name__ == "__main__":
    # Small shapes consistent with the module: channels divisible by 4, in == out channels,
    # 3x3 / pad=1 so the two-layer chain works.
    N, C, H, W, K = 2, 8, 16, 16, 3

    key = jax.random.PRNGKey(0)
    kx, kg, kw1, kb1, kw2, kb2 = jax.random.split(key, 6)
    x = jax.random.normal(kx, (N, C, H, W), jnp.float32)
    # self.guide = torch.rand_like(x)  (sampled once, reused by both convs)
    guide = jax.random.uniform(kg, (N, C, H, W), jnp.float32)

    scale = 1.0 / float(C * K * K) ** 0.5
    params = {
        "w1": jax.random.uniform(kw1, (C, C, K, K), jnp.float32, -scale, scale),
        "b1": jax.random.uniform(kb1, (C,), jnp.float32, -scale, scale),
        "w2": jax.random.uniform(kw2, (C, C, K, K), jnp.float32, -scale, scale),
        "b2": jax.random.uniform(kb2, (C,), jnp.float32, -scale, scale),
    }

    out = jax.block_until_ready(g2conv2d4_random_forward(x, guide, params))

    # Silent correctness check against a pure-JAX reference of the same semantics.
    y1_ref = _gconv2d4_reference(x, guide, params["w1"], params["b1"])
    y2_ref = _gconv2d4_reference(y1_ref, guide, params["w2"], params["b2"])
    assert out.shape == (N, C, H, W)
    assert jnp.allclose(out, y2_ref, rtol=1e-3, atol=1e-3), "mismatch vs reference"

    print("KERNEL_OK")
</pallas_src>

<mosaic_0001>
module attributes {stable_mosaic.version = 11 : i64} {
  func.func @_g2conv_kernel(%arg0: i32, %arg1: memref<8x256xf32, #tpu.memory_space<vmem>>, %arg2: memref<8x256xf32, #tpu.memory_space<vmem>>, %arg3: memref<25x256xf32, #tpu.memory_space<vmem>>, %arg4: memref<8x2xi32, #tpu.memory_space<vmem>>, %arg5: memref<8x72xf32, #tpu.memory_space<vmem>>, %arg6: memref<8x1xf32, #tpu.memory_space<vmem>>, %arg7: memref<8x72xf32, #tpu.memory_space<vmem>>, %arg8: memref<8x1xf32, #tpu.memory_space<vmem>>, %arg9: memref<8x256xf32, #tpu.memory_space<vmem>>) attributes {dimension_semantics = [#tpu.dimension_semantics<parallel>], iteration_bounds = array<i64: 2>, scalar_prefetch = 0 : i64, scratch_operands = 0 : i64, tpu.core_type = #tpu.core_type<tc>, window_params = [{transform_indices = @transform_0, window_bounds = array<i64: 8, 256>}, {transform_indices = @transform_1, window_bounds = array<i64: 8, 256>}, {pipeline_mode = #tpu.pipeline_mode<synchronous>, transform_indices = @transform_2, window_bounds = array<i64: 25, 256>}, {pipeline_mode = #tpu.pipeline_mode<synchronous>, transform_indices = @transform_3, window_bounds = array<i64: 8, 2>}, {pipeline_mode = #tpu.pipeline_mode<synchronous>, transform_indices = @transform_4, window_bounds = array<i64: 8, 72>}, {pipeline_mode = #tpu.pipeline_mode<synchronous>, transform_indices = @transform_5, window_bounds = array<i64: 8, 1>}, {pipeline_mode = #tpu.pipeline_mode<synchronous>, transform_indices = @transform_6, window_bounds = array<i64: 8, 72>}, {pipeline_mode = #tpu.pipeline_mode<synchronous>, transform_indices = @transform_7, window_bounds = array<i64: 8, 1>}, {transform_indices = @transform_8, window_bounds = array<i64: 8, 256>}]} {
    %c0 = arith.constant 0 : index
    %c0_0 = arith.constant 0 : index
    %0 = vector.load %arg1[%c0, %c0_0] : memref<8x256xf32, #tpu.memory_space<vmem>>, vector<8x256xf32>
    %c0_1 = arith.constant 0 : index
    %c0_2 = arith.constant 0 : index
    %1 = vector.load %arg2[%c0_1, %c0_2] : memref<8x256xf32, #tpu.memory_space<vmem>>, vector<8x256xf32>
    %c0_3 = arith.constant 0 : index
    %c0_4 = arith.constant 0 : index
    %2 = vector.load %arg3[%c0_3, %c0_4] : memref<25x256xf32, #tpu.memory_space<vmem>>, vector<1x256xf32>
    %c1 = arith.constant 1 : index
    %c0_5 = arith.constant 0 : index
    %3 = vector.load %arg3[%c1, %c0_5] : memref<25x256xf32, #tpu.memory_space<vmem>>, vector<1x256xf32>
    %c2 = arith.constant 2 : index
    %c0_6 = arith.constant 0 : index
    %4 = vector.load %arg3[%c2, %c0_6] : memref<25x256xf32, #tpu.memory_space<vmem>>, vector<1x256xf32>
    %c3 = arith.constant 3 : index
    %c0_7 = arith.constant 0 : index
    %5 = vector.load %arg3[%c3, %c0_7] : memref<25x256xf32, #tpu.memory_space<vmem>>, vector<1x256xf32>
    %c4 = arith.constant 4 : index
    %c0_8 = arith.constant 0 : index
    %6 = vector.load %arg3[%c4, %c0_8] : memref<25x256xf32, #tpu.memory_space<vmem>>, vector<1x256xf32>
    %c5 = arith.constant 5 : index
    %c0_9 = arith.constant 0 : index
    %7 = vector.load %arg3[%c5, %c0_9] : memref<25x256xf32, #tpu.memory_space<vmem>>, vector<1x256xf32>
    %c6 = arith.constant 6 : index
    %c0_10 = arith.constant 0 : index
    %8 = vector.load %arg3[%c6, %c0_10] : memref<25x256xf32, #tpu.memory_space<vmem>>, vector<1x256xf32>
    %c7 = arith.constant 7 : index
    %c0_11 = arith.constant 0 : index
    %9 = vector.load %arg3[%c7, %c0_11] : memref<25x256xf32, #tpu.memory_space<vmem>>, vector<1x256xf32>
    %c8 = arith.constant 8 : index
    %c0_12 = arith.constant 0 : index
    %10 = vector.load %arg3[%c8, %c0_12] : memref<25x256xf32, #tpu.memory_space<vmem>>, vector<1x256xf32>
    %c9 = arith.constant 9 : index
    %c0_13 = arith.constant 0 : index
    %11 = vector.load %arg3[%c9, %c0_13] : memref<25x256xf32, #tpu.memory_space<vmem>>, vector<1x256xf32>
    %c10 = arith.constant 10 : index
    %c0_14 = arith.constant 0 : index
    %12 = vector.load %arg3[%c10, %c0_14] : memref<25x256xf32, #tpu.memory_space<vmem>>, vector<1x256xf32>
    %c11 = arith.constant 11 : index
    %c0_15 = arith.constant 0 : index
    %13 = vector.load %arg3[%c11, %c0_15] : memref<25x256xf32, #tpu.memory_space<vmem>>, vector<1x256xf32>
    %c12 = arith.constant 12 : index
    %c0_16 = arith.constant 0 : index
    %14 = vector.load %arg3[%c12, %c0_16] : memref<25x256xf32, #tpu.memory_space<vmem>>, vector<1x256xf32>
    %c13 = arith.constant 13 : index
    %c0_17 = arith.constant 0 : index
    %15 = vector.load %arg3[%c13, %c0_17] : memref<25x256xf32, #tpu.memory_space<vmem>>, vector<1x256xf32>
    %c14 = arith.constant 14 : index
    %c0_18 = arith.constant 0 : index
    %16 = vector.load %arg3[%c14, %c0_18] : memref<25x256xf32, #tpu.memory_space<vmem>>, vector<1x256xf32>
    %c15 = arith.constant 15 : index
    %c0_19 = arith.constant 0 : index
    %17 = vector.load %arg3[%c15, %c0_19] : memref<25x256xf32, #tpu.memory_space<vmem>>, vector<1x256xf32>
    %c16 = arith.constant 16 : index
    %c0_20 = arith.constant 0 : index
    %18 = vector.load %arg3[%c16, %c0_20] : memref<25x256xf32, #tpu.memory_space<vmem>>, vector<1x256xf32>
    %c17 = arith.constant 17 : index
    %c0_21 = arith.constant 0 : index
    %19 = vector.load %arg3[%c17, %c0_21] : memref<25x256xf32, #tpu.memory_space<vmem>>, vector<1x256xf32>
    %c18 = arith.constant 18 : index
    %c0_22 = arith.constant 0 : index
    %20 = vector.load %arg3[%c18, %c0_22] : memref<25x256xf32, #tpu.memory_space<vmem>>, vector<1x256xf32>
    %c19 = arith.constant 19 : index
    %c0_23 = arith.constant 0 : index
    %21 = vector.load %arg3[%c19, %c0_23] : memref<25x256xf32, #tpu.memory_space<vmem>>, vector<1x256xf32>
    %c21 = arith.constant 21 : index
    %c0_24 = arith.constant 0 : index
    %22 = vector.load %arg3[%c21, %c0_24] : memref<25x256xf32, #tpu.memory_space<vmem>>, vector<1x256xf32>
    %c22 = arith.constant 22 : index
    %c0_25 = arith.constant 0 : index
    %23 = vector.load %arg3[%c22, %c0_25] : memref<25x256xf32, #tpu.memory_space<vmem>>, vector<1x256xf32>
    %c23 = arith.constant 23 : index
    %c0_26 = arith.constant 0 : index
    %24 = vector.load %arg3[%c23, %c0_26] : memref<25x256xf32, #tpu.memory_space<vmem>>, vector<1x256xf32>
    %c24 = arith.constant 24 : index
    %c0_27 = arith.constant 0 : index
    %25 = vector.load %arg3[%c24, %c0_27] : memref<25x256xf32, #tpu.memory_space<vmem>>, vector<1x256xf32>
    %c0_28 = arith.constant 0 : index
    %c0_29 = arith.constant 0 : index
    %26 = vector.load %arg4[%c0_28, %c0_29] : memref<8x2xi32, #tpu.memory_space<vmem>>, vector<8x1xi32>
    %c0_i32 = arith.constant 0 : i32
    %27 = vector.broadcast %c0_i32 : i32 to vector<8x1xi32>
    %28 = arith.cmpi ne, %26, %27 : vector<8x1xi32>
    %29 = vector.shape_cast %28 : vector<8x1xi1> to vector<8x1xi1>
    %30 = vector.broadcast %29 : vector<8x1xi1> to vector<8x256xi1>
    %c0_30 = arith.constant 0 : index
    %c1_31 = arith.constant 1 : index
    %31 = vector.load %arg4[%c0_30, %c1_31] : memref<8x2xi32, #tpu.memory_space<vmem>>, vector<8x1xi32>
    %c0_i32_32 = arith.constant 0 : i32
    %32 = vector.broadcast %c0_i32_32 : i32 to vector<8x1xi32>
    %33 = arith.cmpi ne, %31, %32 : vector<8x1xi32>
    %34 = vector.shape_cast %33 : vector<8x1xi1> to vector<8x1xi1>
    %35 = vector.broadcast %34 : vector<8x1xi1> to vector<8x256xi1>
    %c1_i32 = arith.constant 1 : i32
    %36 = tpu.dynamic_rotate %1 by %c1_i32 dim 1 : vector<8x256xf32>, i32 -> vector<8x256xf32>
    %37 = vector.broadcast %2 : vector<1x256xf32> to vector<8x256xf32>
    %38 = arith.addf %36, %37 : vector<8x256xf32>
    %c1_i32_33 = arith.constant 1 : i32
    %39 = tpu.dynamic_rotate %0 by %c1_i32_33 dim 1 : vector<8x256xf32>, i32 -> vector<8x256xf32>
    %40 = arith.cmpf ogt, %38, %1 : vector<8x256xf32>
    %41 = arith.select %40, %38, %1 : vector<8x256xi1>, vector<8x256xf32>
    %42 = arith.select %40, %39, %0 : vector<8x256xi1>, vector<8x256xf32>
    %c2_i32 = arith.constant 2 : i32
    %43 = tpu.dynamic_rotate %41 by %c2_i32 dim 1 : vector<8x256xf32>, i32 -> vector<8x256xf32>
    %44 = vector.broadcast %3 : vector<1x256xf32> to vector<8x256xf32>
    %45 = arith.addf %43, %44 : vector<8x256xf32>
    %c2_i32_34 = arith.constant 2 : i32
    %46 = tpu.dynamic_rotate %42 by %c2_i32_34 dim 1 : vector<8x256xf32>, i32 -> vector<8x256xf32>
    %47 = arith.cmpf ogt, %45, %41 : vector<8x256xf32>
    %48 = arith.select %47, %45, %41 : vector<8x256xi1>, vector<8x256xf32>
    %49 = arith.select %47, %46, %42 : vector<8x256xi1>, vector<8x256xf32>
    %c4_i32 = arith.constant 4 : i32
    %50 = tpu.dynamic_rotate %48 by %c4_i32 dim 1 : vector<8x256xf32>, i32 -> vector<8x256xf32>
    %51 = vector.broadcast %4 : vector<1x256xf32> to vector<8x256xf32>
    %52 = arith.addf %50, %51 : vector<8x256xf32>
    %c4_i32_35 = arith.constant 4 : i32
    %53 = tpu.dynamic_rotate %49 by %c4_i32_35 dim 1 : vector<8x256xf32>, i32 -> vector<8x256xf32>
    %54 = arith.cmpf ogt, %52, %48 : vector<8x256xf32>
    %55 = arith.select %54, %52, %48 : vector<8x256xi1>, vector<8x256xf32>
    %56 = arith.select %54, %53, %49 : vector<8x256xi1>, vector<8x256xf32>
    %c8_i32 = arith.constant 8 : i32
    %57 = tpu.dynamic_rotate %55 by %c8_i32 dim 1 : vector<8x256xf32>, i32 -> vector<8x256xf32>
    %58 = vector.broadcast %5 : vector<1x256xf32> to vector<8x256xf32>
    %59 = arith.addf %57, %58 : vector<8x256xf32>
    %c8_i32_36 = arith.constant 8 : i32
    %60 = tpu.dynamic_rotate %56 by %c8_i32_36 dim 1 : vector<8x256xf32>, i32 -> vector<8x256xf32>
    %61 = arith.cmpf ogt, %59, %55 : vector<8x256xf32>
    %62 = arith.select %61, %59, %55 : vector<8x256xi1>, vector<8x256xf32>
    %63 = arith.select %61, %60, %56 : vector<8x256xi1>, vector<8x256xf32>
    %c255_i32 = arith.constant 255 : i32
    %64 = tpu.dynamic_rotate %1 by %c255_i32 dim 1 : vector<8x256xf32>, i32 -> vector<8x256xf32>
    %65 = vector.broadcast %6 : vector<1x256xf32> to vector<8x256xf32>
    %66 = arith.addf %64, %65 : vector<8x256xf32>
    %c255_i32_37 = arith.constant 255 : i32
    %67 = tpu.dynamic_rotate %0 by %c255_i32_37 dim 1 : vector<8x256xf32>, i32 -> vector<8x256xf32>
    %68 = arith.cmpf ogt, %66, %1 : vector<8x256xf32>
    %69 = arith.select %68, %66, %1 : vector<8x256xi1>, vector<8x256xf32>
    %70 = arith.select %68, %67, %0 : vector<8x256xi1>, vector<8x256xf32>
    %c254_i32 = arith.constant 254 : i32
    %71 = tpu.dynamic_rotate %69 by %c254_i32 dim 1 : vector<8x256xf32>, i32 -> vector<8x256xf32>
    %72 = vector.broadcast %7 : vector<1x256xf32> to vector<8x256xf32>
    %73 = arith.addf %71, %72 : vector<8x256xf32>
    %c254_i32_38 = arith.constant 254 : i32
    %74 = tpu.dynamic_rotate %70 by %c254_i32_38 dim 1 : vector<8x256xf32>, i32 -> vector<8x256xf32>
    %75 = arith.cmpf ogt, %73, %69 : vector<8x256xf32>
    %76 = arith.select %75, %73, %69 : vector<8x256xi1>, vector<8x256xf32>
    %77 = arith.select %75, %74, %70 : vector<8x256xi1>, vector<8x256xf32>
    %c252_i32 = arith.constant 252 : i32
    %78 = tpu.dynamic_rotate %76 by %c252_i32 dim 1 : vector<8x256xf32>, i32 -> vector<8x256xf32>
    %79 = vector.broadcast %8 : vector<1x256xf32> to vector<8x256xf32>
    %80 = arith.addf %78, %79 : vector<8x256xf32>
    %c252_i32_39 = arith.constant 252 : i32
    %81 = tpu.dynamic_rotate %77 by %c252_i32_39 dim 1 : vector<8x256xf32>, i32 -> vector<8x256xf32>
    %82 = arith.cmpf ogt, %80, %76 : vector<8x256xf32>
    %83 = arith.select %82, %80, %76 : vector<8x256xi1>, vector<8x256xf32>
    %84 = arith.select %82, %81, %77 : vector<8x256xi1>, vector<8x256xf32>
    %c248_i32 = arith.constant 248 : i32
    %85 = tpu.dynamic_rotate %83 by %c248_i32 dim 1 : vector<8x256xf32>, i32 -> vector<8x256xf32>
    %86 = vector.broadcast %9 : vector<1x256xf32> to vector<8x256xf32>
    %87 = arith.addf %85, %86 : vector<8x256xf32>
    %c248_i32_40 = arith.constant 248 : i32
    %88 = tpu.dynamic_rotate %84 by %c248_i32_40 dim 1 : vector<8x256xf32>, i32 -> vector<8x256xf32>
    %89 = arith.cmpf ogt, %87, %83 : vector<8x256xf32>
    %90 = arith.select %89, %87, %83 : vector<8x256xi1>, vector<8x256xf32>
    %91 = arith.select %89, %88, %84 : vector<8x256xi1>, vector<8x256xf32>
    %92 = arith.select %30, %90, %62 : vector<8x256xi1>, vector<8x256xf32>
    %93 = arith.select %30, %91, %63 : vector<8x256xi1>, vector<8x256xf32>
    %c16_i32 = arith.constant 16 : i32
    %94 = tpu.dynamic_rotate %92 by %c16_i32 dim 1 : vector<8x256xf32>, i32 -> vector<8x256xf32>
    %95 = vector.broadcast %10 : vector<1x256xf32> to vector<8x256xf32>
    %96 = arith.addf %94, %95 : vector<8x256xf32>
    %c16_i32_41 = arith.constant 16 : i32
    %97 = tpu.dynamic_rotate %93 by %c16_i32_41 dim 1 : vector<8x256xf32>, i32 -> vector<8x256xf32>
    %98 = arith.cmpf ogt, %96, %92 : vector<8x256xf32>
    %99 = arith.select %98, %96, %92 : vector<8x256xi1>, vector<8x256xf32>
    %100 = arith.select %98, %97, %93 : vector<8x256xi1>, vector<8x256xf32>
    %c32_i32 = arith.constant 32 : i32
    %101 = tpu.dynamic_rotate %99 by %c32_i32 dim 1 : vector<8x256xf32>, i32 -> vector<8x256xf32>
    %102 = vector.broadcast %11 : vector<1x256xf32> to vector<8x256xf32>
    %103 = arith.addf %101, %102 : vector<8x256xf32>
    %c32_i32_42 = arith.constant 32 : i32
    %104 = tpu.dynamic_rotate %100 by %c32_i32_42 dim 1 : vector<8x256xf32>, i32 -> vector<8x256xf32>
    %105 = arith.cmpf ogt, %103, %99 : vector<8x256xf32>
    %106 = arith.select %105, %103, %99 : vector<8x256xi1>, vector<8x256xf32>
    %107 = arith.select %105, %104, %100 : vector<8x256xi1>, vector<8x256xf32>
    %c64_i32 = arith.constant 64 : i32
    %108 = tpu.dynamic_rotate %106 by %c64_i32 dim 1 : vector<8x256xf32>, i32 -> vector<8x256xf32>
    %109 = vector.broadcast %12 : vector<1x256xf32> to vector<8x256xf32>
    %110 = arith.addf %108, %109 : vector<8x256xf32>
    %c64_i32_43 = arith.constant 64 : i32
    %111 = tpu.dynamic_rotate %107 by %c64_i32_43 dim 1 : vector<8x256xf32>, i32 -> vector<8x256xf32>
    %112 = arith.cmpf ogt, %110, %106 : vector<8x256xf32>
    %113 = arith.select %112, %110, %106 : vector<8x256xi1>, vector<8x256xf32>
    %114 = arith.select %112, %111, %107 : vector<8x256xi1>, vector<8x256xf32>
    %c128_i32 = arith.constant 128 : i32
    %115 = tpu.dynamic_rotate %113 by %c128_i32 dim 1 : vector<8x256xf32>, i32 -> vector<8x256xf32>
    %116 = vector.broadcast %13 : vector<1x256xf32> to vector<8x256xf32>
    %117 = arith.addf %115, %116 : vector<8x256xf32>
    %c128_i32_44 = arith.constant 128 : i32
    %118 = tpu.dynamic_rotate %114 by %c128_i32_44 dim 1 : vector<8x256xf32>, i32 -> vector<8x256xf32>
    %119 = arith.cmpf ogt, %117, %113 : vector<8x256xf32>
    %120 = arith.select %119, %118, %114 : vector<8x256xi1>, vector<8x256xf32>
    %c240_i32 = arith.constant 240 : i32
    %121 = tpu.dynamic_rotate %92 by %c240_i32 dim 1 : vector<8x256xf32>, i32 -> vector<8x256xf32>
    %122 = vector.broadcast %14 : vector<1x256xf32> to vector<8x256xf32>
    %123 = arith.addf %121, %122 : vector<8x256xf32>
    %c240_i32_45 = arith.constant 240 : i32
    %124 = tpu.dynamic_rotate %93 by %c240_i32_45 dim 1 : vector<8x256xf32>, i32 -> vector<8x256xf32>
    %125 = arith.cmpf ogt, %123, %92 : vector<8x256xf32>
    %126 = arith.select %125, %123, %92 : vector<8x256xi1>, vector<8x256xf32>
    %127 = arith.select %125, %124, %93 : vector<8x256xi1>, vector<8x256xf32>
    %c224_i32 = arith.constant 224 : i32
    %128 = tpu.dynamic_rotate %126 by %c224_i32 dim 1 : vector<8x256xf32>, i32 -> vector<8x256xf32>
    %129 = vector.broadcast %15 : vector<1x256xf32> to vector<8x256xf32>
    %130 = arith.addf %128, %129 : vector<8x256xf32>
    %c224_i32_46 = arith.constant 224 : i32
    %131 = tpu.dynamic_rotate %127 by %c224_i32_46 dim 1 : vector<8x256xf32>, i32 -> vector<8x256xf32>
    %132 = arith.cmpf ogt, %130, %126 : vector<8x256xf32>
    %133 = arith.select %132, %130, %126 : vector<8x256xi1>, vector<8x256xf32>
    %134 = arith.select %132, %131, %127 : vector<8x256xi1>, vector<8x256xf32>
    %c192_i32 = arith.constant 192 : i32
    %135 = tpu.dynamic_rotate %133 by %c192_i32 dim 1 : vector<8x256xf32>, i32 -> vector<8x256xf32>
    %136 = vector.broadcast %16 : vector<1x256xf32> to vector<8x256xf32>
    %137 = arith.addf %135, %136 : vector<8x256xf32>
    %c192_i32_47 = arith.constant 192 : i32
    %138 = tpu.dynamic_rotate %134 by %c192_i32_47 dim 1 : vector<8x256xf32>, i32 -> vector<8x256xf32>
    %139 = arith.cmpf ogt, %137, %133 : vector<8x256xf32>
    %140 = arith.select %139, %137, %133 : vector<8x256xi1>, vector<8x256xf32>
    %141 = arith.select %139, %138, %134 : vector<8x256xi1>, vector<8x256xf32>
    %c128_i32_48 = arith.constant 128 : i32
    %142 = tpu.dynamic_rotate %140 by %c128_i32_48 dim 1 : vector<8x256xf32>, i32 -> vector<8x256xf32>
    %143 = vector.broadcast %17 : vector<1x256xf32> to vector<8x256xf32>
    %144 = arith.addf %142, %143 : vector<8x256xf32>
    %c128_i32_49 = arith.constant 128 : i32
    %145 = tpu.dynamic_rotate %141 by %c128_i32_49 dim 1 : vector<8x256xf32>, i32 -> vector<8x256xf32>
    %146 = arith.cmpf ogt, %144, %140 : vector<8x256xf32>
    %147 = arith.select %146, %145, %141 : vector<8x256xi1>, vector<8x256xf32>
    %148 = arith.select %35, %147, %120 : vector<8x256xi1>, vector<8x256xf32>
    %c17_i32 = arith.constant 17 : i32
    %149 = tpu.dynamic_rotate %148 by %c17_i32 dim 1 : vector<8x256xf32>, i32 -> vector<8x256xf32>
    %150 = vector.broadcast %18 : vector<1x256xf32> to vector<8x256xf32>
    %151 = arith.mulf %149, %150 : vector<8x256xf32>
    %c16_i32_50 = arith.constant 16 : i32
    %152 = tpu.dynamic_rotate %148 by %c16_i32_50 dim 1 : vector<8x256xf32>, i32 -> vector<8x256xf32>
    %153 = vector.broadcast %19 : vector<1x256xf32> to vector<8x256xf32>
    %154 = arith.mulf %152, %153 : vector<8x256xf32>
    %c15_i32 = arith.constant 15 : i32
    %155 = tpu.dynamic_rotate %148 by %c15_i32 dim 1 : vector<8x256xf32>, i32 -> vector<8x256xf32>
    %156 = vector.broadcast %20 : vector<1x256xf32> to vector<8x256xf32>
    %157 = arith.mulf %155, %156 : vector<8x256xf32>
    %c0_51 = arith.constant 0 : index
    %c0_52 = arith.constant 0 : index
    %158 = vector.load %arg5[%c0_51, %c0_52] : memref<8x72xf32, #tpu.memory_space<vmem>>, vector<8x24xf32>
    %159 = tpu.concatenate %151, %154, %157 in 0 : vector<8x256xf32>, vector<8x256xf32>, vector<8x256xf32> -> vector<24x256xf32>
    %cst = arith.constant dense<0.000000e+00> : vector<8x256xf32>
    %160 = tpu.matmul %158, %159, %cst {dimension_numbers = #tpu.dot_dimension_numbers<[1], [0], [0], [1], [0, 0, 1, 1], [], []>} : vector<8x24xf32>, vector<24x256xf32>, vector<8x256xf32> -> vector<8x256xf32>
    %c1_i32_53 = arith.constant 1 : i32
    %161 = tpu.dynamic_rotate %148 by %c1_i32_53 dim 1 : vector<8x256xf32>, i32 -> vector<8x256xf32>
    %162 = vector.broadcast %21 : vector<1x256xf32> to vector<8x256xf32>
    %163 = arith.mulf %161, %162 : vector<8x256xf32>
    %c255_i32_54 = arith.constant 255 : i32
    %164 = tpu.dynamic_rotate %148 by %c255_i32_54 dim 1 : vector<8x256xf32>, i32 -> vector<8x256xf32>
    %165 = vector.broadcast %22 : vector<1x256xf32> to vector<8x256xf32>
    %166 = arith.mulf %164, %165 : vector<8x256xf32>
    %c0_55 = arith.constant 0 : index
    %c24_56 = arith.constant 24 : index
    %167 = vector.load %arg5[%c0_55, %c24_56] : memref<8x72xf32, #tpu.memory_space<vmem>>, vector<8x24xf32>
    %168 = tpu.concatenate %163, %148, %166 in 0 : vector<8x256xf32>, vector<8x256xf32>, vector<8x256xf32> -> vector<24x256xf32>
    %cst_57 = arith.constant dense<0.000000e+00> : vector<8x256xf32>
    %169 = tpu.matmul %167, %168, %cst_57 {dimension_numbers = #tpu.dot_dimension_numbers<[1], [0], [0], [1], [0, 0, 1, 1], [], []>} : vector<8x24xf32>, vector<24x256xf32>, vector<8x256xf32> -> vector<8x256xf32>
    %170 = arith.addf %160, %169 : vector<8x256xf32>
    %c241_i32 = arith.constant 241 : i32
    %171 = tpu.dynamic_rotate %148 by %c241_i32 dim 1 : vector<8x256xf32>, i32 -> vector<8x256xf32>
    %172 = vector.broadcast %23 : vector<1x256xf32> to vector<8x256xf32>
    %173 = arith.mulf %171, %172 : vector<8x256xf32>
    %c240_i32_58 = arith.constant 240 : i32
    %174 = tpu.dynamic_rotate %148 by %c240_i32_58 dim 1 : vector<8x256xf32>, i32 -> vector<8x256xf32>
    %175 = vector.broadcast %24 : vector<1x256xf32> to vector<8x256xf32>
    %176 = arith.mulf %174, %175 : vector<8x256xf32>
    %c239_i32 = arith.constant 239 : i32
    %177 = tpu.dynamic_rotate %148 by %c239_i32 dim 1 : vector<8x256xf32>, i32 -> vector<8x256xf32>
    %178 = vector.broadcast %25 : vector<1x256xf32> to vector<8x256xf32>
    %179 = arith.mulf %177, %178 : vector<8x256xf32>
    %c0_59 = arith.constant 0 : index
    %c48 = arith.constant 48 : index
    %180 = vector.load %arg5[%c0_59, %c48] : memref<8x72xf32, #tpu.memory_space<vmem>>, vector<8x24xf32>
    %181 = tpu.concatenate %173, %176, %179 in 0 : vector<8x256xf32>, vector<8x256xf32>, vector<8x256xf32> -> vector<24x256xf32>
    %cst_60 = arith.constant dense<0.000000e+00> : vector<8x256xf32>
    %182 = tpu.matmul %180, %181, %cst_60 {dimension_numbers = #tpu.dot_dimension_numbers<[1], [0], [0], [1], [0, 0, 1, 1], [], []>} : vector<8x24xf32>, vector<24x256xf32>, vector<8x256xf32> -> vector<8x256xf32>
    %183 = arith.addf %170, %182 : vector<8x256xf32>
    %c0_61 = arith.constant 0 : index
    %c0_62 = arith.constant 0 : index
    %184 = vector.load %arg6[%c0_61, %c0_62] : memref<8x1xf32, #tpu.memory_space<vmem>>, vector<8x1xf32>
    %185 = vector.broadcast %184 : vector<8x1xf32> to vector<8x256xf32>
    %186 = arith.addf %183, %185 : vector<8x256xf32>
    %c1_i32_63 = arith.constant 1 : i32
    %187 = tpu.dynamic_rotate %1 by %c1_i32_63 dim 1 : vector<8x256xf32>, i32 -> vector<8x256xf32>
    %188 = vector.broadcast %2 : vector<1x256xf32> to vector<8x256xf32>
    %189 = arith.addf %187, %188 : vector<8x256xf32>
    %c1_i32_64 = arith.constant 1 : i32
    %190 = tpu.dynamic_rotate %186 by %c1_i32_64 dim 1 : vector<8x256xf32>, i32 -> vector<8x256xf32>
    %191 = arith.cmpf ogt, %189, %1 : vector<8x256xf32>
    %192 = arith.select %191, %189, %1 : vector<8x256xi1>, vector<8x256xf32>
    %193 = arith.select %191, %190, %186 : vector<8x256xi1>, vector<8x256xf32>
    %c2_i32_65 = arith.constant 2 : i32
    %194 = tpu.dynamic_rotate %192 by %c2_i32_65 dim 1 : vector<8x256xf32>, i32 -> vector<8x256xf32>
    %195 = vector.broadcast %3 : vector<1x256xf32> to vector<8x256xf32>
    %196 = arith.addf %194, %195 : vector<8x256xf32>
    %c2_i32_66 = arith.constant 2 : i32
    %197 = tpu.dynamic_rotate %193 by %c2_i32_66 dim 1 : vector<8x256xf32>, i32 -> vector<8x256xf32>
    %198 = arith.cmpf ogt, %196, %192 : vector<8x256xf32>
    %199 = arith.select %198, %196, %192 : vector<8x256xi1>, vector<8x256xf32>
    %200 = arith.select %198, %197, %193 : vector<8x256xi1>, vector<8x256xf32>
    %c4_i32_67 = arith.constant 4 : i32
    %201 = tpu.dynamic_rotate %199 by %c4_i32_67 dim 1 : vector<8x256xf32>, i32 -> vector<8x256xf32>
    %202 = vector.broadcast %4 : vector<1x256xf32> to vector<8x256xf32>
    %203 = arith.addf %201, %202 : vector<8x256xf32>
    %c4_i32_68 = arith.constant 4 : i32
    %204 = tpu.dynamic_rotate %200 by %c4_i32_68 dim 1 : vector<8x256xf32>, i32 -> vector<8x256xf32>
    %205 = arith.cmpf ogt, %203, %199 : vector<8x256xf32>
    %206 = arith.select %205, %203, %199 : vector<8x256xi1>, vector<8x256xf32>
    %207 = arith.select %205, %204, %200 : vector<8x256xi1>, vector<8x256xf32>
    %c8_i32_69 = arith.constant 8 : i32
    %208 = tpu.dynamic_rotate %206 by %c8_i32_69 dim 1 : vector<8x256xf32>, i32 -> vector<8x256xf32>
    %209 = vector.broadcast %5 : vector<1x256xf32> to vector<8x256xf32>
    %210 = arith.addf %208, %209 : vector<8x256xf32>
    %c8_i32_70 = arith.constant 8 : i32
    %211 = tpu.dynamic_rotate %207 by %c8_i32_70 dim 1 : vector<8x256xf32>, i32 -> vector<8x256xf32>
    %212 = arith.cmpf ogt, %210, %206 : vector<8x256xf32>
    %213 = arith.select %212, %210, %206 : vector<8x256xi1>, vector<8x256xf32>
    %214 = arith.select %212, %211, %207 : vector<8x256xi1>, vector<8x256xf32>
    %c255_i32_71 = arith.constant 255 : i32
    %215 = tpu.dynamic_rotate %1 by %c255_i32_71 dim 1 : vector<8x256xf32>, i32 -> vector<8x256xf32>
    %216 = vector.broadcast %6 : vector<1x256xf32> to vector<8x256xf32>
    %217 = arith.addf %215, %216 : vector<8x256xf32>
    %c255_i32_72 = arith.constant 255 : i32
    %218 = tpu.dynamic_rotate %186 by %c255_i32_72 dim 1 : vector<8x256xf32>, i32 -> vector<8x256xf32>
    %219 = arith.cmpf ogt, %217, %1 : vector<8x256xf32>
    %220 = arith.select %219, %217, %1 : vector<8x256xi1>, vector<8x256xf32>
    %221 = arith.select %219, %218, %186 : vector<8x256xi1>, vector<8x256xf32>
    %c254_i32_73 = arith.constant 254 : i32
    %222 = tpu.dynamic_rotate %220 by %c254_i32_73 dim 1 : vector<8x256xf32>, i32 -> vector<8x256xf32>
    %223 = vector.broadcast %7 : vector<1x256xf32> to vector<8x256xf32>
    %224 = arith.addf %222, %223 : vector<8x256xf32>
    %c254_i32_74 = arith.constant 254 : i32
    %225 = tpu.dynamic_rotate %221 by %c254_i32_74 dim 1 : vector<8x256xf32>, i32 -> vector<8x256xf32>
    %226 = arith.cmpf ogt, %224, %220 : vector<8x256xf32>
    %227 = arith.select %226, %224, %220 : vector<8x256xi1>, vector<8x256xf32>
    %228 = arith.select %226, %225, %221 : vector<8x256xi1>, vector<8x256xf32>
    %c252_i32_75 = arith.constant 252 : i32
    %229 = tpu.dynamic_rotate %227 by %c252_i32_75 dim 1 : vector<8x256xf32>, i32 -> vector<8x256xf32>
    %230 = vector.broadcast %8 : vector<1x256xf32> to vector<8x256xf32>
    %231 = arith.addf %229, %230 : vector<8x256xf32>
    %c252_i32_76 = arith.constant 252 : i32
    %232 = tpu.dynamic_rotate %228 by %c252_i32_76 dim 1 : vector<8x256xf32>, i32 -> vector<8x256xf32>
    %233 = arith.cmpf ogt, %231, %227 : vector<8x256xf32>
    %234 = arith.select %233, %231, %227 : vector<8x256xi1>, vector<8x256xf32>
    %235 = arith.select %233, %232, %228 : vector<8x256xi1>, vector<8x256xf32>
    %c248_i32_77 = arith.constant 248 : i32
    %236 = tpu.dynamic_rotate %234 by %c248_i32_77 dim 1 : vector<8x256xf32>, i32 -> vector<8x256xf32>
    %237 = vector.broadcast %9 : vector<1x256xf32> to vector<8x256xf32>
    %238 = arith.addf %236, %237 : vector<8x256xf32>
    %c248_i32_78 = arith.constant 248 : i32
    %239 = tpu.dynamic_rotate %235 by %c248_i32_78 dim 1 : vector<8x256xf32>, i32 -> vector<8x256xf32>
    %240 = arith.cmpf ogt, %238, %234 : vector<8x256xf32>
    %241 = arith.select %240, %238, %234 : vector<8x256xi1>, vector<8x256xf32>
    %242 = arith.select %240, %239, %235 : vector<8x256xi1>, vector<8x256xf32>
    %243 = arith.select %30, %241, %213 : vector<8x256xi1>, vector<8x256xf32>
    %244 = arith.select %30, %242, %214 : vector<8x256xi1>, vector<8x256xf32>
    %c16_i32_79 = arith.constant 16 : i32
    %245 = tpu.dynamic_rotate %243 by %c16_i32_79 dim 1 : vector<8x256xf32>, i32 -> vector<8x256xf32>
    %246 = vector.broadcast %10 : vector<1x256xf32> to vector<8x256xf32>
    %247 = arith.addf %245, %246 : vector<8x256xf32>
    %c16_i32_80 = arith.constant 16 : i32
    %248 = tpu.dynamic_rotate %244 by %c16_i32_80 dim 1 : vector<8x256xf32>, i32 -> vector<8x256xf32>
    %249 = arith.cmpf ogt, %247, %243 : vector<8x256xf32>
    %250 = arith.select %249, %247, %243 : vector<8x256xi1>, vector<8x256xf32>
    %251 = arith.select %249, %248, %244 : vector<8x256xi1>, vector<8x256xf32>
    %c32_i32_81 = arith.constant 32 : i32
    %252 = tpu.dynamic_rotate %250 by %c32_i32_81 dim 1 : vector<8x256xf32>, i32 -> vector<8x256xf32>
    %253 = vector.broadcast %11 : vector<1x256xf32> to vector<8x256xf32>
    %254 = arith.addf %252, %253 : vector<8x256xf32>
    %c32_i32_82 = arith.constant 32 : i32
    %255 = tpu.dynamic_rotate %251 by %c32_i32_82 dim 1 : vector<8x256xf32>, i32 -> vector<8x256xf32>
    %256 = arith.cmpf ogt, %254, %250 : vector<8x256xf32>
    %257 = arith.select %256, %254, %250 : vector<8x256xi1>, vector<8x256xf32>
    %258 = arith.select %256, %255, %251 : vector<8x256xi1>, vector<8x256xf32>
    %c64_i32_83 = arith.constant 64 : i32
    %259 = tpu.dynamic_rotate %257 by %c64_i32_83 dim 1 : vector<8x256xf32>, i32 -> vector<8x256xf32>
    %260 = vector.broadcast %12 : vector<1x256xf32> to vector<8x256xf32>
    %261 = arith.addf %259, %260 : vector<8x256xf32>
    %c64_i32_84 = arith.constant 64 : i32
    %262 = tpu.dynamic_rotate %258 by %c64_i32_84 dim 1 : vector<8x256xf32>, i32 -> vector<8x256xf32>
    %263 = arith.cmpf ogt, %261, %257 : vector<8x256xf32>
    %264 = arith.select %263, %261, %257 : vector<8x256xi1>, vector<8x256xf32>
    %265 = arith.select %263, %262, %258 : vector<8x256xi1>, vector<8x256xf32>
    %c128_i32_85 = arith.constant 128 : i32
    %266 = tpu.dynamic_rotate %264 by %c128_i32_85 dim 1 : vector<8x256xf32>, i32 -> vector<8x256xf32>
    %267 = vector.broadcast %13 : vector<1x256xf32> to vector<8x256xf32>
    %268 = arith.addf %266, %267 : vector<8x256xf32>
    %c128_i32_86 = arith.constant 128 : i32
    %269 = tpu.dynamic_rotate %265 by %c128_i32_86 dim 1 : vector<8x256xf32>, i32 -> vector<8x256xf32>
    %270 = arith.cmpf ogt, %268, %264 : vector<8x256xf32>
    %271 = arith.select %270, %269, %265 : vector<8x256xi1>, vector<8x256xf32>
    %c240_i32_87 = arith.constant 240 : i32
    %272 = tpu.dynamic_rotate %243 by %c240_i32_87 dim 1 : vector<8x256xf32>, i32 -> vector<8x256xf32>
    %273 = vector.broadcast %14 : vector<1x256xf32> to vector<8x256xf32>
    %274 = arith.addf %272, %273 : vector<8x256xf32>
    %c240_i32_88 = arith.constant 240 : i32
    %275 = tpu.dynamic_rotate %244 by %c240_i32_88 dim 1 : vector<8x256xf32>, i32 -> vector<8x256xf32>
    %276 = arith.cmpf ogt, %274, %243 : vector<8x256xf32>
    %277 = arith.select %276, %274, %243 : vector<8x256xi1>, vector<8x256xf32>
    %278 = arith.select %276, %275, %244 : vector<8x256xi1>, vector<8x256xf32>
    %c224_i32_89 = arith.constant 224 : i32
    %279 = tpu.dynamic_rotate %277 by %c224_i32_89 dim 1 : vector<8x256xf32>, i32 -> vector<8x256xf32>
    %280 = vector.broadcast %15 : vector<1x256xf32> to vector<8x256xf32>
    %281 = arith.addf %279, %280 : vector<8x256xf32>
    %c224_i32_90 = arith.constant 224 : i32
    %282 = tpu.dynamic_rotate %278 by %c224_i32_90 dim 1 : vector<8x256xf32>, i32 -> vector<8x256xf32>
    %283 = arith.cmpf ogt, %281, %277 : vector<8x256xf32>
    %284 = arith.select %283, %281, %277 : vector<8x256xi1>, vector<8x256xf32>
    %285 = arith.select %283, %282, %278 : vector<8x256xi1>, vector<8x256xf32>
    %c192_i32_91 = arith.constant 192 : i32
    %286 = tpu.dynamic_rotate %284 by %c192_i32_91 dim 1 : vector<8x256xf32>, i32 -> vector<8x256xf32>
    %287 = vector.broadcast %16 : vector<1x256xf32> to vector<8x256xf32>
    %288 = arith.addf %286, %287 : vector<8x256xf32>
    %c192_i32_92 = arith.constant 192 : i32
    %289 = tpu.dynamic_rotate %285 by %c192_i32_92 dim 1 : vector<8x256xf32>, i32 -> vector<8x256xf32>
    %290 = arith.cmpf ogt, %288, %284 : vector<8x256xf32>
    %291 = arith.select %290, %288, %284 : vector<8x256xi1>, vector<8x256xf32>
    %292 = arith.select %290, %289, %285 : vector<8x256xi1>, vector<8x256xf32>
    %c128_i32_93 = arith.constant 128 : i32
    %293 = tpu.dynamic_rotate %291 by %c128_i32_93 dim 1 : vector<8x256xf32>, i32 -> vector<8x256xf32>
    %294 = vector.broadcast %17 : vector<1x256xf32> to vector<8x256xf32>
    %295 = arith.addf %293, %294 : vector<8x256xf32>
    %c128_i32_94 = arith.constant 128 : i32
    %296 = tpu.dynamic_rotate %292 by %c128_i32_94 dim 1 : vector<8x256xf32>, i32 -> vector<8x256xf32>
    %297 = arith.cmpf ogt, %295, %291 : vector<8x256xf32>
    %298 = arith.select %297, %296, %292 : vector<8x256xi1>, vector<8x256xf32>
    %299 = arith.select %35, %298, %271 : vector<8x256xi1>, vector<8x256xf32>
    %c17_i32_95 = arith.constant 17 : i32
    %300 = tpu.dynamic_rotate %299 by %c17_i32_95 dim 1 : vector<8x256xf32>, i32 -> vector<8x256xf32>
    %301 = vector.broadcast %18 : vector<1x256xf32> to vector<8x256xf32>
    %302 = arith.mulf %300, %301 : vector<8x256xf32>
    %c16_i32_96 = arith.constant 16 : i32
    %303 = tpu.dynamic_rotate %299 by %c16_i32_96 dim 1 : vector<8x256xf32>, i32 -> vector<8x256xf32>
    %304 = vector.broadcast %19 : vector<1x256xf32> to vector<8x256xf32>
    %305 = arith.mulf %303, %304 : vector<8x256xf32>
    %c15_i32_97 = arith.constant 15 : i32
    %306 = tpu.dynamic_rotate %299 by %c15_i32_97 dim 1 : vector<8x256xf32>, i32 -> vector<8x256xf32>
    %307 = vector.broadcast %20 : vector<1x256xf32> to vector<8x256xf32>
    %308 = arith.mulf %306, %307 : vector<8x256xf32>
    %c0_98 = arith.constant 0 : index
    %c0_99 = arith.constant 0 : index
    %309 = vector.load %arg7[%c0_98, %c0_99] : memref<8x72xf32, #tpu.memory_space<vmem>>, vector<8x24xf32>
    %310 = tpu.concatenate %302, %305, %308 in 0 : vector<8x256xf32>, vector<8x256xf32>, vector<8x256xf32> -> vector<24x256xf32>
    %cst_100 = arith.constant dense<0.000000e+00> : vector<8x256xf32>
    %311 = tpu.matmul %309, %310, %cst_100 {dimension_numbers = #tpu.dot_dimension_numbers<[1], [0], [0], [1], [0, 0, 1, 1], [], []>} : vector<8x24xf32>, vector<24x256xf32>, vector<8x256xf32> -> vector<8x256xf32>
    %c1_i32_101 = arith.constant 1 : i32
    %312 = tpu.dynamic_rotate %299 by %c1_i32_101 dim 1 : vector<8x256xf32>, i32 -> vector<8x256xf32>
    %313 = vector.broadcast %21 : vector<1x256xf32> to vector<8x256xf32>
    %314 = arith.mulf %312, %313 : vector<8x256xf32>
    %c255_i32_102 = arith.constant 255 : i32
    %315 = tpu.dynamic_rotate %299 by %c255_i32_102 dim 1 : vector<8x256xf32>, i32 -> vector<8x256xf32>
    %316 = vector.broadcast %22 : vector<1x256xf32> to vector<8x256xf32>
    %317 = arith.mulf %315, %316 : vector<8x256xf32>
    %c0_103 = arith.constant 0 : index
    %c24_104 = arith.constant 24 : index
    %318 = vector.load %arg7[%c0_103, %c24_104] : memref<8x72xf32, #tpu.memory_space<vmem>>, vector<8x24xf32>
    %319 = tpu.concatenate %314, %299, %317 in 0 : vector<8x256xf32>, vector<8x256xf32>, vector<8x256xf32> -> vector<24x256xf32>
    %cst_105 = arith.constant dense<0.000000e+00> : vector<8x256xf32>
    %320 = tpu.matmul %318, %319, %cst_105 {dimension_numbers = #tpu.dot_dimension_numbers<[1], [0], [0], [1], [0, 0, 1, 1], [], []>} : vector<8x24xf32>, vector<24x256xf32>, vector<8x256xf32> -> vector<8x256xf32>
    %321 = arith.addf %311, %320 : vector<8x256xf32>
    %c241_i32_106 = arith.constant 241 : i32
    %322 = tpu.dynamic_rotate %299 by %c241_i32_106 dim 1 : vector<8x256xf32>, i32 -> vector<8x256xf32>
    %323 = vector.broadcast %23 : vector<1x256xf32> to vector<8x256xf32>
    %324 = arith.mulf %322, %323 : vector<8x256xf32>
    %c240_i32_107 = arith.constant 240 : i32
    %325 = tpu.dynamic_rotate %299 by %c240_i32_107 dim 1 : vector<8x256xf32>, i32 -> vector<8x256xf32>
    %326 = vector.broadcast %24 : vector<1x256xf32> to vector<8x256xf32>
    %327 = arith.mulf %325, %326 : vector<8x256xf32>
    %c239_i32_108 = arith.constant 239 : i32
    %328 = tpu.dynamic_rotate %299 by %c239_i32_108 dim 1 : vector<8x256xf32>, i32 -> vector<8x256xf32>
    %329 = vector.broadcast %25 : vector<1x256xf32> to vector<8x256xf32>
    %330 = arith.mulf %328, %329 : vector<8x256xf32>
    %c0_109 = arith.constant 0 : index
    %c48_110 = arith.constant 48 : index
    %331 = vector.load %arg7[%c0_109, %c48_110] : memref<8x72xf32, #tpu.memory_space<vmem>>, vector<8x24xf32>
    %332 = tpu.concatenate %324, %327, %330 in 0 : vector<8x256xf32>, vector<8x256xf32>, vector<8x256xf32> -> vector<24x256xf32>
    %cst_111 = arith.constant dense<0.000000e+00> : vector<8x256xf32>
    %333 = tpu.matmul %331, %332, %cst_111 {dimension_numbers = #tpu.dot_dimension_numbers<[1], [0], [0], [1], [0, 0, 1, 1], [], []>} : vector<8x24xf32>, vector<24x256xf32>, vector<8x256xf32> -> vector<8x256xf32>
    %334 = arith.addf %321, %333 : vector<8x256xf32>
    %c0_112 = arith.constant 0 : index
    %c0_113 = arith.constant 0 : index
    %335 = vector.load %arg8[%c0_112, %c0_113] : memref<8x1xf32, #tpu.memory_space<vmem>>, vector<8x1xf32>
    %336 = vector.broadcast %335 : vector<8x1xf32> to vector<8x256xf32>
    %337 = arith.addf %334, %336 : vector<8x256xf32>
    %c0_114 = arith.constant 0 : index
    %c0_115 = arith.constant 0 : index
    %338 = vector.load %arg9[%c0_114, %c0_115] : memref<8x256xf32, #tpu.memory_space<vmem>>, vector<8x256xf32>
    tpu.vector_store %arg9[%c0_114, %c0_115], %337 {strides = array<i32>} : memref<8x256xf32, #tpu.memory_space<vmem>>, vector<8x256xf32>,
    return
  }
  func.func @transform_0(%arg0: i32) -> (i32, i32) {
    %c0_i32 = arith.constant 0 : i32
    %c0_i32_0 = arith.constant 0 : i32
    return %arg0, %c0_i32 : i32, i32
  }
  func.func @transform_1(%arg0: i32) -> (i32, i32) {
    %c0_i32 = arith.constant 0 : i32
    %c0_i32_0 = arith.constant 0 : i32
    return %arg0, %c0_i32 : i32, i32
  }
  func.func @transform_2(%arg0: i32) -> (i32, i32) {
    %c0_i32 = arith.constant 0 : i32
    %c0_i32_0 = arith.constant 0 : i32
    %c0_i32_1 = arith.constant 0 : i32
    return %c0_i32, %c0_i32_0 : i32, i32
  }
  func.func @transform_3(%arg0: i32) -> (i32, i32) {
    %c0_i32 = arith.constant 0 : i32
    %c0_i32_0 = arith.constant 0 : i32
    %c0_i32_1 = arith.constant 0 : i32
    return %c0_i32, %c0_i32_0 : i32, i32
  }
  func.func @transform_4(%arg0: i32) -> (i32, i32) {
    %c0_i32 = arith.constant 0 : i32
    %c0_i32_0 = arith.constant 0 : i32
    %c0_i32_1 = arith.constant 0 : i32
    return %c0_i32, %c0_i32_0 : i32, i32
  }
  func.func @transform_5(%arg0: i32) -> (i32, i32) {
    %c0_i32 = arith.constant 0 : i32
    %c0_i32_0 = arith.constant 0 : i32
    %c0_i32_1 = arith.constant 0 : i32
    return %c0_i32, %c0_i32_0 : i32, i32
  }
  func.func @transform_6(%arg0: i32) -> (i32, i32) {
    %c0_i32 = arith.constant 0 : i32
    %c0_i32_0 = arith.constant 0 : i32
    %c0_i32_1 = arith.constant 0 : i32
    return %c0_i32, %c0_i32_0 : i32, i32
  }
  func.func @transform_7(%arg0: i32) -> (i32, i32) {
    %c0_i32 = arith.constant 0 : i32
    %c0_i32_0 = arith.constant 0 : i32
    %c0_i32_1 = arith.constant 0 : i32
    return %c0_i32, %c0_i32_0 : i32, i32
  }
  func.func @transform_8(%arg0: i32) -> (i32, i32) {
    %c0_i32 = arith.constant 0 : i32
    %c0_i32_0 = arith.constant 0 : i32
    return %arg0, %c0_i32 : i32, i32
  }
}

</mosaic_0001>

<llo_original>
// kernel: g2conv2d4_random_forward.1
$region0: #{g2conv2d4_random_forward.1}
  #allocation0 [shape = 'u32[]', space=smem, size = 0x4, offset = 0x4, fixed_abs, tag = 'smem constant byte address 0x4 - core index']
  #allocation1 [shape = 'u32[144,128]{1,0:T(1,128)}', space=vmem, size = 0x12000, scoped, tag = 'internal scratch']
  %s0 = inlined_call_operand.vmem [shape: f32[16,256], index: 0, kind: input, shape index: {}]
  %s1 = inlined_call_operand.vmem [shape: f32[16,256], index: 1, kind: input, shape index: {}]
  %s2 = inlined_call_operand.vmem [shape: f32[25,256], index: 2, kind: input, shape index: {}]
  %s3 = inlined_call_operand.vmem [shape: s32[8,2], index: 3, kind: input, shape index: {}]
  %s4 = inlined_call_operand.vmem [shape: f32[8,72], index: 4, kind: input, shape index: {}]
  %s5 = inlined_call_operand.vmem [shape: f32[8,1], index: 5, kind: input, shape index: {}]
  %s6 = inlined_call_operand.vmem [shape: f32[8,72], index: 6, kind: input, shape index: {}]
  %s7 = inlined_call_operand.vmem [shape: f32[8,1], index: 7, kind: input, shape index: {}]
  %s8 = inlined_call_operand.vmem [shape: f32[16,256], index: 8, kind: output, shape index: {}]
  %s9 = sld [smem:[#allocation0]]
  $region65: #{g2conv2d4_random_forward.1} parent=0
    _
  %s11 = ssub.s32 1, %s9
  %s12 = scalar_select 0, %s11, %s9
  loop: start=0, step=1, limit=4
  $region2: #{g2conv2d4_random_forward.1} parent=0 // loop_pre_header
    _
  $region3: #{g2conv2d4_random_forward.1} parent=0 // loop_header
    %s14 = sphi 0, %s18
    %p15 = scmp.ge.s32.totalorder %s14, 4
    %s24 = sphi 0, %s26
    %s27 = sphi 0, %s24
    %s28 = sphi 0, %s27
    %s44 = sphi 0, %s28
    %s50 = sphi 0, %s52
    %s53 = sphi 0, %s50
    %s54 = sphi 0, %s53
    %s70 = sphi 0, %s54
    %s74 = sphi 0, %s74
    %s76 = sphi 0, %s74
    %s77 = sphi 0, %s76
    %s91 = sphi 0, %s77
    %s95 = sphi 0, %s95
    %s97 = sphi 0, %s95
    %s98 = sphi 0, %s97
    %s112 = sphi 0, %s98
    %s116 = sphi 0, %s116
    %s118 = sphi 0, %s116
    %s119 = sphi 0, %s118
    %s133 = sphi 0, %s119
    %s137 = sphi 0, %s137
    %s139 = sphi 0, %s137
    %s140 = sphi 0, %s139
    %s154 = sphi 0, %s140
    %s158 = sphi 0, %s158
    %s160 = sphi 0, %s158
    %s161 = sphi 0, %s160
    %s175 = sphi 0, %s161
    %s179 = sphi 0, %s179
    %s181 = sphi 0, %s179
    %s182 = sphi 0, %s181
    %s196 = sphi 0, %s182
    %s202 = sphi 0, %s204
    %s205 = sphi 0, %s202
    %s206 = sphi 0, %s205
    %s222 = sphi 0, %s206
  $region4: #{g2conv2d4_random_forward.1} parent=0 // loop_header_branch
    %17 = sbr.rel (%p15) target = $region8
  $region5: #{g2conv2d4_random_forward.1} parent=0 // loop_body
    %s19 = ssub.s32 %s14, 1
    %s20 = ssub.s32 %s14, 2
    %s21 = sadd.s32 %s14, 1
    %s22 = ssub.s32 %s14, %s21
    %p23 = scmp.eq.s32.totalorder %s22, 0
    %s25 = sadd.s32 %s24, 1
    %s26 = scalar_select %p23, %s24, %s25
    %p29 = pneg %p23
    %p30 = scmp.eq.s32.totalorder %s14, 1
    %p31 = por %p29, %p30
    %p32 = scmp.ne.s32.totalorder %s24, %s27
    %p33 = scmp.eq.s32.totalorder %s14, 0
    %p34 = por %p32, %p33
    %p35 = scmp.ne.s32.totalorder %s24, %s27
    %p36 = scmp.eq.s32.totalorder %s19, 1
    %p37 = por %p35, %p36
    %p38 = scmp.ne.s32.totalorder %s27, %s28
    %p39 = scmp.eq.s32.totalorder %s19, 0
    %p40 = por %p38, %p39
    %p41 = scmp.ne.s32.totalorder %s27, %s28
    %p42 = scmp.eq.s32.totalorder %s20, 1
    %p43 = por %p41, %p42
    %p45 = scmp.ne.s32.totalorder %s28, %s44
    %p46 = scmp.eq.s32.totalorder %s20, 0
    %p47 = por %p45, %p46
    %s48 = ssub.s32 %s14, %s21
    %p49 = scmp.eq.s32.totalorder %s48, 0
    %s51 = sadd.s32 %s50, 1
    %s52 = scalar_select %p49, %s50, %s51
    %p55 = pneg %p49
    %p56 = scmp.eq.s32.totalorder %s14, 1
    %p57 = por %p55, %p56
    %p58 = scmp.ne.s32.totalorder %s50, %s53
    %p59 = scmp.eq.s32.totalorder %s14, 0
    %p60 = por %p58, %p59
    %p61 = scmp.ne.s32.totalorder %s50, %s53
    %p62 = scmp.eq.s32.totalorder %s19, 1
    %p63 = por %p61, %p62
    %p64 = scmp.ne.s32.totalorder %s53, %s54
    %p65 = scmp.eq.s32.totalorder %s19, 0
    %p66 = por %p64, %p65
    %p67 = scmp.ne.s32.totalorder %s53, %s54
    %p68 = scmp.eq.s32.totalorder %s20, 1
    %p69 = por %p67, %p68
    %p71 = scmp.ne.s32.totalorder %s54, %s70
    %p72 = scmp.eq.s32.totalorder %s20, 0
    %p73 = por %p71, %p72
    %s75 = sadd.s32 %s74, 1
    %p78 = scmp.eq.s32.totalorder %s14, 1
    %p79 = scmp.ne.s32.totalorder %s74, %s76
    %p80 = scmp.eq.s32.totalorder %s14, 0
    %p81 = por %p79, %p80
    %p82 = scmp.ne.s32.totalorder %s74, %s76
    %p83 = scmp.eq.s32.totalorder %s19, 1
    %p84 = por %p82, %p83
    %p85 = scmp.ne.s32.totalorder %s76, %s77
    %p86 = scmp.eq.s32.totalorder %s19, 0
    %p87 = por %p85, %p86
    %p88 = scmp.ne.s32.totalorder %s76, %s77
    %p89 = scmp.eq.s32.totalorder %s20, 1
    %p90 = por %p88, %p89
    %p92 = scmp.ne.s32.totalorder %s77, %s91
    %p93 = scmp.eq.s32.totalorder %s20, 0
    %p94 = por %p92, %p93
    %s96 = sadd.s32 %s95, 1
    %p99 = scmp.eq.s32.totalorder %s14, 1
    %p100 = scmp.ne.s32.totalorder %s95, %s97
    %p101 = scmp.eq.s32.totalorder %s14, 0
    %p102 = por %p100, %p101
    %p103 = scmp.ne.s32.totalorder %s95, %s97
    %p104 = scmp.eq.s32.totalorder %s19, 1
    %p105 = por %p103, %p104
    %p106 = scmp.ne.s32.totalorder %s97, %s98
    %p107 = scmp.eq.s32.totalorder %s19, 0
    %p108 = por %p106, %p107
    %p109 = scmp.ne.s32.totalorder %s97, %s98
    %p110 = scmp.eq.s32.totalorder %s20, 1
    %p111 = por %p109, %p110
    %p113 = scmp.ne.s32.totalorder %s98, %s112
    %p114 = scmp.eq.s32.totalorder %s20, 0
    %p115 = por %p113, %p114
    %s117 = sadd.s32 %s116, 1
    %p120 = scmp.eq.s32.totalorder %s14, 1
    %p121 = scmp.ne.s32.totalorder %s116, %s118
    %p122 = scmp.eq.s32.totalorder %s14, 0
    %p123 = por %p121, %p122
    %p124 = scmp.ne.s32.totalorder %s116, %s118
    %p125 = scmp.eq.s32.totalorder %s19, 1
    %p126 = por %p124, %p125
    %p127 = scmp.ne.s32.totalorder %s118, %s119
    %p128 = scmp.eq.s32.totalorder %s19, 0
    %p129 = por %p127, %p128
    %p130 = scmp.ne.s32.totalorder %s118, %s119
    %p131 = scmp.eq.s32.totalorder %s20, 1
    %p132 = por %p130, %p131
    %p134 = scmp.ne.s32.totalorder %s119, %s133
    %p135 = scmp.eq.s32.totalorder %s20, 0
    %p136 = por %p134, %p135
    %s138 = sadd.s32 %s137, 1
    %p141 = scmp.eq.s32.totalorder %s14, 1
    %p142 = scmp.ne.s32.totalorder %s137, %s139
    %p143 = scmp.eq.s32.totalorder %s14, 0
    %p144 = por %p142, %p143
    %p145 = scmp.ne.s32.totalorder %s137, %s139
    %p146 = scmp.eq.s32.totalorder %s19, 1
    %p147 = por %p145, %p146
    %p148 = scmp.ne.s32.totalorder %s139, %s140
    %p149 = scmp.eq.s32.totalorder %s19, 0
    %p150 = por %p148, %p149
    %p151 = scmp.ne.s32.totalorder %s139, %s140
    %p152 = scmp.eq.s32.totalorder %s20, 1
    %p153 = por %p151, %p152
    %p155 = scmp.ne.s32.totalorder %s140, %s154
    %p156 = scmp.eq.s32.totalorder %s20, 0
    %p157 = por %p155, %p156
    %s159 = sadd.s32 %s158, 1
    %p162 = scmp.eq.s32.totalorder %s14, 1
    %p163 = scmp.ne.s32.totalorder %s158, %s160
    %p164 = scmp.eq.s32.totalorder %s14, 0
    %p165 = por %p163, %p164
    %p166 = scmp.ne.s32.totalorder %s158, %s160
    %p167 = scmp.eq.s32.totalorder %s19, 1
    %p168 = por %p166, %p167
    %p169 = scmp.ne.s32.totalorder %s160, %s161
    %p170 = scmp.eq.s32.totalorder %s19, 0
    %p171 = por %p169, %p170
    %p172 = scmp.ne.s32.totalorder %s160, %s161
    %p173 = scmp.eq.s32.totalorder %s20, 1
    %p174 = por %p172, %p173
    %p176 = scmp.ne.s32.totalorder %s161, %s175
    %p177 = scmp.eq.s32.totalorder %s20, 0
    %p178 = por %p176, %p177
    %s180 = sadd.s32 %s179, 1
    %p183 = scmp.eq.s32.totalorder %s14, 1
    %p184 = scmp.ne.s32.totalorder %s179, %s181
    %p185 = scmp.eq.s32.totalorder %s14, 0
    %p186 = por %p184, %p185
    %p187 = scmp.ne.s32.totalorder %s179, %s181
    %p188 = scmp.eq.s32.totalorder %s19, 1
    %p189 = por %p187, %p188
    %p190 = scmp.ne.s32.totalorder %s181, %s182
    %p191 = scmp.eq.s32.totalorder %s19, 0
    %p192 = por %p190, %p191
    %p193 = scmp.ne.s32.totalorder %s181, %s182
    %p194 = scmp.eq.s32.totalorder %s20, 1
    %p195 = por %p193, %p194
    %p197 = scmp.ne.s32.totalorder %s182, %s196
    %p198 = scmp.eq.s32.totalorder %s20, 0
    %p199 = por %p197, %p198
    %s200 = ssub.s32 %s14, %s21
    %p201 = scmp.eq.s32.totalorder %s200, 0
    %s203 = sadd.s32 %s202, 1
    %s204 = scalar_select %p201, %s202, %s203
    %p207 = pneg %p201
    %p208 = scmp.eq.s32.totalorder %s14, 1
    %p209 = por %p207, %p208
    %p210 = scmp.ne.s32.totalorder %s202, %s205
    %p211 = scmp.eq.s32.totalorder %s14, 0
    %p212 = por %p210, %p211
    %p213 = scmp.ne.s32.totalorder %s202, %s205
    %p214 = scmp.eq.s32.totalorder %s19, 1
    %p215 = por %p213, %p214
    %p216 = scmp.ne.s32.totalorder %s205, %s206
    %p217 = scmp.eq.s32.totalorder %s19, 0
    %p218 = por %p216, %p217
    %p219 = scmp.ne.s32.totalorder %s205, %s206
    %p220 = scmp.eq.s32.totalorder %s20, 1
    %p221 = por %p219, %p220
    %p223 = scmp.ne.s32.totalorder %s206, %s222
    %p224 = scmp.eq.s32.totalorder %s20, 0
    %p225 = por %p223, %p224
    %p226 = scmp.le.s32.totalorder 1, %s14
    %p227 = scmp.lt.s32.totalorder %s14, 3
    %p228 = pnand %p226, %p227
    %p229 = pneg %p228
    // Predicated region
    $region9: #{g2conv2d4_random_forward.1} parent=5 // pred_check
      _
    $region10: #{g2conv2d4_random_forward.1} parent=5 // pred_check_branch
      %231 = sbr.rel (%p228) target = $region12
    $region11: #{g2conv2d4_random_forward.1} parent=5 // pred_region
      %s232 = ssub.s32 %s14, 1
      // Predicated region
      $region13: #{g2conv2d4_random_forward.1} parent=11 // pred_check
        %p233 = pneg %p87
      $region14: #{g2conv2d4_random_forward.1} parent=11 // pred_check_branch
        %235 = sbr.rel (%p233) target = $region16
      $region15: #{g2conv2d4_random_forward.1} parent=11 // pred_region
        _
      $region16: #{g2conv2d4_random_forward.1} parent=11 // pred_fallthru
        _
      // Predicated region
      $region17: #{g2conv2d4_random_forward.1} parent=11 // pred_check
        %p236 = pneg %p108
      $region18: #{g2conv2d4_random_forward.1} parent=11 // pred_check_branch
        %238 = sbr.rel (%p236) target = $region20
      $region19: #{g2conv2d4_random_forward.1} parent=11 // pred_region
        _
      $region20: #{g2conv2d4_random_forward.1} parent=11 // pred_fallthru
        _
      // Predicated region
      $region21: #{g2conv2d4_random_forward.1} parent=11 // pred_check
        %p239 = pneg %p129
      $region22: #{g2conv2d4_random_forward.1} parent=11 // pred_check_branch
        %241 = sbr.rel (%p239) target = $region24
      $region23: #{g2conv2d4_random_forward.1} parent=11 // pred_region
        _
      $region24: #{g2conv2d4_random_forward.1} parent=11 // pred_fallthru
        _
      // Predicated region
      $region25: #{g2conv2d4_random_forward.1} parent=11 // pred_check
        %p242 = pneg %p150
      $region26: #{g2conv2d4_random_forward.1} parent=11 // pred_check_branch
        %244 = sbr.rel (%p242) target = $region28
      $region27: #{g2conv2d4_random_forward.1} parent=11 // pred_region
        _
      $region28: #{g2conv2d4_random_forward.1} parent=11 // pred_fallthru
        _
      // Predicated region
      $region29: #{g2conv2d4_random_forward.1} parent=11 // pred_check
        %p245 = pneg %p171
      $region30: #{g2conv2d4_random_forward.1} parent=11 // pred_check_branch
        %247 = sbr.rel (%p245) target = $region32
      $region31: #{g2conv2d4_random_forward.1} parent=11 // pred_region
        _
      $region32: #{g2conv2d4_random_forward.1} parent=11 // pred_fallthru
        _
      // Predicated region
      $region33: #{g2conv2d4_random_forward.1} parent=11 // pred_check
        %p248 = pneg %p192
      $region34: #{g2conv2d4_random_forward.1} parent=11 // pred_check_branch
        %250 = sbr.rel (%p248) target = $region36
      $region35: #{g2conv2d4_random_forward.1} parent=11 // pred_region
        _
      $region36: #{g2conv2d4_random_forward.1} parent=11 // pred_fallthru
        _
    $region12: #{g2conv2d4_random_forward.1} parent=5 // pred_fallthru
      _
    %p251 = scmp.lt.s32.totalorder %s14, 2
    // Predicated region
    $region37: #{g2conv2d4_random_forward.1} parent=5 // pred_check
      %p252 = pneg %p251
    $region38: #{g2conv2d4_random_forward.1} parent=5 // pred_check_branch
      %254 = sbr.rel (%p252) target = $region40
    $region39: #{g2conv2d4_random_forward.1} parent=5 // pred_region
      // Predicated region
      $region41: #{g2conv2d4_random_forward.1} parent=39 // pred_check
        %p255 = pneg %p34
      $region42: #{g2conv2d4_random_forward.1} parent=39 // pred_check_branch
        %257 = sbr.rel (%p255) target = $region44
      $region43: #{g2conv2d4_random_forward.1} parent=39 // pred_region
        %p258 = scmp.lt.s32.totalorder %s14, 1
        %s259 = scalar_select %p258, %s14, 1
        %s260 = smul.addr %s259, 2
        %s261 = smul.addr %s260, 8
        %s262 = scalar_lea.vmem %s0, %s261
      $region44: #{g2conv2d4_random_forward.1} parent=39 // pred_fallthru
        _
      // Predicated region
      $region45: #{g2conv2d4_random_forward.1} parent=39 // pred_check
        %p263 = pneg %p60
      $region46: #{g2conv2d4_random_forward.1} parent=39 // pred_check_branch
        %265 = sbr.rel (%p263) target = $region48
      $region47: #{g2conv2d4_random_forward.1} parent=39 // pred_region
        %p266 = scmp.lt.s32.totalorder %s14, 1
        %s267 = scalar_select %p266, %s14, 1
        %s268 = smul.addr %s267, 2
        %s269 = smul.addr %s268, 8
        %s270 = scalar_lea.vmem %s1, %s269
      $region48: #{g2conv2d4_random_forward.1} parent=39 // pred_fallthru
        _
    $region40: #{g2conv2d4_random_forward.1} parent=5 // pred_fallthru
      _
    %p271 = scmp.le.s32.totalorder 1, %s14
    %p272 = scmp.lt.s32.totalorder %s14, 3
    %p273 = pnand %p271, %p272
    %p274 = pneg %p273
    // Predicated region
    $region49: #{g2conv2d4_random_forward.1} parent=5 // pred_check
      _
    $region50: #{g2conv2d4_random_forward.1} parent=5 // pred_check_branch
      %276 = sbr.rel (%p273) target = $region52
    $region51: #{g2conv2d4_random_forward.1} parent=5 // pred_region
      %s277 = ssub.s32 %s14, 1
      %p278 = scmp.lt.s32.totalorder %s19, 1
      %s279 = scalar_select %p278, %s19, 1
      %s280 = smul.addr %s279, 2
      %s281 = smul.addr %s280, 8
      %s282 = scalar_lea.vmem %s0, %s281
      %p283 = pneg %p40
      %p284 = pneg %p37
      %p285 = scmp.lt.s32.totalorder %s19, 1
      %s286 = scalar_select %p285, %s19, 1
      %s287 = smul.addr %s286, 2
      %s288 = smul.addr %s287, 8
      %s289 = scalar_lea.vmem %s1, %s288
      %p290 = pneg %p66
      %p291 = pneg %p63
      %p292 = pneg %p87
      %p293 = pneg %p84
      %p294 = pneg %p108
      %p295 = pneg %p105
      %p296 = pneg %p129
      %p297 = pneg %p126
      %p298 = pneg %p150
      %p299 = pneg %p147
      %p300 = pneg %p171
      %p301 = pneg %p168
      %p302 = pneg %p192
      %p303 = pneg %p189
      %p304 = pneg %p218
      %p305 = pneg %p215
      %p306 = scmp.lt.s32.totalorder %s19, 1
      %s307 = scalar_select %p306, %s19, 1
      %s308 = smul.addr %s307, 2
      %s309 = smul.addr %s308, 8
      %s310 = scalar_lea.vmem %s8, %s309
      %p311 = scmp.lt.s32.totalorder %s19, 1
      %s312 = scalar_select %p311, %s19, 1
      %s313 = smul.addr %s312, 2
      %s314 = smul.addr %s313, 8
      %s315 = scalar_lea.vmem %s0, %s314
      %p316 = scmp.lt.s32.totalorder %s19, 1
      %s317 = scalar_select %p316, %s19, 1
      %s318 = smul.addr %s317, 2
      %s319 = smul.addr %s318, 8
      %s320 = scalar_lea.vmem %s1, %s319
      %p321 = scmp.lt.s32.totalorder %s19, 1
      %s322 = scalar_select %p321, %s19, 1
      %s323 = smul.addr %s322, 2
      %s324 = smul.addr %s323, 8
      %s325 = scalar_lea.vmem %s8, %s324
      %v326 = vld [vmem:[%s315] sm:$0xff]
      %v327 = vld [vmem:[%s315 + $0x8] sm:$0xff]
      %v328 = vld [vmem:[%s320] sm:$0xff]
      %v329 = vld [vmem:[%s320 + $0x8] sm:$0xff]
      %v330 = vld [vmem:[%s2] ss:$8 sm:$0x3]
      %s331 = scalar_lea.vmem %s2, 1
      %v332 = vld [vmem:[%s331] ss:$8 sm:$0x3]
      %s333 = scalar_lea.vmem %s2, 2
      %v334 = vld [vmem:[%s333] ss:$8 sm:$0x3]
      %s335 = scalar_lea.vmem %s2, 3
      %v336 = vld [vmem:[%s335] ss:$8 sm:$0x3]
      %s337 = scalar_lea.vmem %s2, 4
      %v338 = vld [vmem:[%s337] ss:$8 sm:$0x3]
      %s339 = scalar_lea.vmem %s2, 5
      %v340 = vld [vmem:[%s339] ss:$8 sm:$0x3]
      %s341 = scalar_lea.vmem %s2, 6
      %v342 = vld [vmem:[%s341] ss:$8 sm:$0x3]
      %s343 = scalar_lea.vmem %s2, 7
      %v344 = vld [vmem:[%s343] ss:$8 sm:$0x3]
      %s345 = scalar_lea.vmem %s2, 16
      %v346 = vld [vmem:[%s345] ss:$8 sm:$0x3]
      %s347 = scalar_lea.vmem %s2, 17
      %v348 = vld [vmem:[%s347] ss:$8 sm:$0x3]
      %s349 = scalar_lea.vmem %s2, 18
      %v350 = vld [vmem:[%s349] ss:$8 sm:$0x3]
      %s351 = scalar_lea.vmem %s2, 19
      %v352 = vld [vmem:[%s351] ss:$8 sm:$0x3]
      %s353 = scalar_lea.vmem %s2, 20
      %v354 = vld [vmem:[%s353] ss:$8 sm:$0x3]
      %s355 = scalar_lea.vmem %s2, 21
      %v356 = vld [vmem:[%s355] ss:$8 sm:$0x3]
      %s357 = scalar_lea.vmem %s2, 22
      %v358 = vld [vmem:[%s357] ss:$8 sm:$0x3]
      %s359 = scalar_lea.vmem %s2, 23
      %v360 = vld [vmem:[%s359] ss:$8 sm:$0x3]
      %s361 = scalar_lea.vmem %s2, 32
      %v362 = vld [vmem:[%s361] ss:$8 sm:$0x3]
      %s363 = scalar_lea.vmem %s2, 33
      %v364 = vld [vmem:[%s363] ss:$8 sm:$0x3]
      %s365 = scalar_lea.vmem %s2, 34
      %v366 = vld [vmem:[%s365] ss:$8 sm:$0x3]
      %s367 = scalar_lea.vmem %s2, 35
      %v368 = vld [vmem:[%s367] ss:$8 sm:$0x3]
      %s369 = scalar_lea.vmem %s2, 37
      %v370 = vld [vmem:[%s369] ss:$8 sm:$0x3]
      %s371 = scalar_lea.vmem %s2, 38
      %v372 = vld [vmem:[%s371] ss:$8 sm:$0x3]
      %s373 = scalar_lea.vmem %s2, 39
      %v374 = vld [vmem:[%s373] ss:$8 sm:$0x3]
      %s375 = scalar_lea.vmem %s2, 48
      %v376 = vld [vmem:[%s375] ss:$8 sm:$0x3]
      %v377 = vld [vmem:[%s3] sm:$0xff]
      %vm378 = vcmp.ne.s32.totalorder %v377, 0
      %v379 = vsel %vm378, 1, 0
      %380 = vset.pattern.permute.xlu0 0
      %381 = vperm.xlu0 %380, %v379
      %v382 = vpop.permute.xlu0 %381
      %vm383 = vcmp.eq.s32.totalorder %v382, 1
      %384 = vset.pattern.permute.xlu0 1
      %385 = vperm.xlu0 %384, %v379
      %v386 = vpop.permute.xlu0 %385
      %vm387 = vcmp.eq.s32.totalorder %v386, 1
      %388 = vrot.lane.b32.xlu0 %v328, 1
      %v389 = vpop.permute.xlu0 %388
      %390 = vrot.lane.b32.xlu0 %v329, 1
      %v391 = vpop.permute.xlu0 %390
      %v392 = vlaneseq
      %v393 = vand.u32 %v392, 127
      %vm394 = vcmp.lt.s32.totalorder %v393, 1
      %v395 = vsel %vm394, %v389, %v391
      %v396 = vsel %vm394, %v391, %v389
      %v398 = vlaneseq
      %v399 = vshrl.u32 %v398, 7
      %v400 = vsub.s32 0, %v399
      %v401 = vrot.slane %v330, %v400
      %v402 = vlaneseq
      %v403 = vshrl.u32 %v402, 7
      %v404 = vsub.s32 1, %v403
      %v405 = vrot.slane %v330, %v404
      %v408 = vadd.f32 %v396, %v401
      %v409 = vadd.f32 %v395, %v405
      %410 = vrot.lane.b32.xlu0 %v326, 1
      %v411 = vpop.permute.xlu0 %410
      %412 = vrot.lane.b32.xlu0 %v327, 1
      %v413 = vpop.permute.xlu0 %412
      %v414 = vsel %vm394, %v411, %v413
      %v415 = vsel %vm394, %v413, %v411
      %vm416 = vcmp.gt.f32.partialorder %v408, %v328
      %vm417 = vcmp.gt.f32.partialorder %v409, %v329
      %v418 = vsel %vm416, %v408, %v328
      %v419 = vsel %vm417, %v409, %v329
      %v420 = vsel %vm416, %v415, %v326
      %v421 = vsel %vm417, %v414, %v327
      %422 = vrot.lane.b32.xlu0 %v418, 2
      %v423 = vpop.permute.xlu0 %422
      %424 = vrot.lane.b32.xlu0 %v419, 2
      %v425 = vpop.permute.xlu0 %424
      %vm426 = vcmp.lt.s32.totalorder %v393, 2
      %v427 = vsel %vm426, %v423, %v425
      %v428 = vsel %vm426, %v425, %v423
      %v430 = vlaneseq
      %v431 = vshrl.u32 %v430, 7
      %v432 = vsub.s32 0, %v431
      %v433 = vrot.slane %v332, %v432
      %v434 = vlaneseq
      %v435 = vshrl.u32 %v434, 7
      %v436 = vsub.s32 1, %v435
      %v437 = vrot.slane %v332, %v436
      %v440 = vadd.f32 %v428, %v433
      %v441 = vadd.f32 %v427, %v437
      %442 = vrot.lane.b32.xlu0 %v420, 2
      %v443 = vpop.permute.xlu0 %442
      %444 = vrot.lane.b32.xlu0 %v421, 2
      %v445 = vpop.permute.xlu0 %444
      %v446 = vsel %vm426, %v443, %v445
      %v447 = vsel %vm426, %v445, %v443
      %vm448 = vcmp.gt.f32.partialorder %v440, %v418
      %vm449 = vcmp.gt.f32.partialorder %v441, %v419
      %v450 = vsel %vm448, %v440, %v418
      %v451 = vsel %vm449, %v441, %v419
      %v452 = vsel %vm448, %v447, %v420
      %v453 = vsel %vm449, %v446, %v421
      %454 = vrot.lane.b32.xlu0 %v450, 4
      %v455 = vpop.permute.xlu0 %454
      %456 = vrot.lane.b32.xlu0 %v451, 4
      %v457 = vpop.permute.xlu0 %456
      %vm458 = vcmp.lt.s32.totalorder %v393, 4
      %v459 = vsel %vm458, %v455, %v457
      %v460 = vsel %vm458, %v457, %v455
      %v462 = vlaneseq
      %v463 = vshrl.u32 %v462, 7
      %v464 = vsub.s32 0, %v463
      %v465 = vrot.slane %v334, %v464
      %v466 = vlaneseq
      %v467 = vshrl.u32 %v466, 7
      %v468 = vsub.s32 1, %v467
      %v469 = vrot.slane %v334, %v468
      %v472 = vadd.f32 %v460, %v465
      %v473 = vadd.f32 %v459, %v469
      %474 = vrot.lane.b32.xlu0 %v452, 4
      %v475 = vpop.permute.xlu0 %474
      %476 = vrot.lane.b32.xlu0 %v453, 4
      %v477 = vpop.permute.xlu0 %476
      %v478 = vsel %vm458, %v475, %v477
      %v479 = vsel %vm458, %v477, %v475
      %vm480 = vcmp.gt.f32.partialorder %v472, %v450
      %vm481 = vcmp.gt.f32.partialorder %v473, %v451
      %v482 = vsel %vm480, %v472, %v450
      %v483 = vsel %vm481, %v473, %v451
      %v484 = vsel %vm480, %v479, %v452
      %v485 = vsel %vm481, %v478, %v453
      %486 = vrot.lane.b32.xlu0 %v482, 8
      %v487 = vpop.permute.xlu0 %486
      %488 = vrot.lane.b32.xlu0 %v483, 8
      %v489 = vpop.permute.xlu0 %488
      %vm490 = vcmp.lt.s32.totalorder %v393, 8
      %v491 = vsel %vm490, %v487, %v489
      %v492 = vsel %vm490, %v489, %v487
      %v494 = vlaneseq
      %v495 = vshrl.u32 %v494, 7
      %v496 = vsub.s32 0, %v495
      %v497 = vrot.slane %v336, %v496
      %v498 = vlaneseq
      %v499 = vshrl.u32 %v498, 7
      %v500 = vsub.s32 1, %v499
      %v501 = vrot.slane %v336, %v500
      %v504 = vadd.f32 %v492, %v497
      %v505 = vadd.f32 %v491, %v501
      %506 = vrot.lane.b32.xlu0 %v484, 8
      %v507 = vpop.permute.xlu0 %506
      %508 = vrot.lane.b32.xlu0 %v485, 8
      %v509 = vpop.permute.xlu0 %508
      %v510 = vsel %vm490, %v507, %v509
      %v511 = vsel %vm490, %v509, %v507
      %vm512 = vcmp.gt.f32.partialorder %v504, %v482
      %vm513 = vcmp.gt.f32.partialorder %v505, %v483
      %v514 = vsel %vm512, %v504, %v482
      %v515 = vsel %vm513, %v505, %v483
      %v516 = vsel %vm512, %v511, %v484
      %v517 = vsel %vm513, %v510, %v485
      %518 = vrot.lane.b32.xlu0 %v328, 127
      %v519 = vpop.permute.xlu0 %518
      %520 = vrot.lane.b32.xlu0 %v329, 127
      %v521 = vpop.permute.xlu0 %520
      %vm522 = vcmp.lt.s32.totalorder %v393, 127
      %v523 = vsel %vm522, %v519, %v521
      %v524 = vsel %vm522, %v521, %v519
      %v526 = vlaneseq
      %v527 = vshrl.u32 %v526, 7
      %v528 = vsub.s32 0, %v527
      %v529 = vrot.slane %v338, %v528
      %v530 = vlaneseq
      %v531 = vshrl.u32 %v530, 7
      %v532 = vsub.s32 1, %v531
      %v533 = vrot.slane %v338, %v532
      %v536 = vadd.f32 %v523, %v529
      %v537 = vadd.f32 %v524, %v533
      %538 = vrot.lane.b32.xlu0 %v326, 127
      %v539 = vpop.permute.xlu0 %538
      %540 = vrot.lane.b32.xlu0 %v327, 127
      %v541 = vpop.permute.xlu0 %540
      %v542 = vsel %vm522, %v539, %v541
      %v543 = vsel %vm522, %v541, %v539
      %vm544 = vcmp.gt.f32.partialorder %v536, %v328
      %vm545 = vcmp.gt.f32.partialorder %v537, %v329
      %v546 = vsel %vm544, %v536, %v328
      %v547 = vsel %vm545, %v537, %v329
      %v548 = vsel %vm544, %v542, %v326
      %v549 = vsel %vm545, %v543, %v327
      %550 = vrot.lane.b32.xlu0 %v546, 126
      %v551 = vpop.permute.xlu0 %550
      %552 = vrot.lane.b32.xlu0 %v547, 126
      %v553 = vpop.permute.xlu0 %552
      %vm554 = vcmp.lt.s32.totalorder %v393, 126
      %v555 = vsel %vm554, %v551, %v553
      %v556 = vsel %vm554, %v553, %v551
      %v558 = vlaneseq
      %v559 = vshrl.u32 %v558, 7
      %v560 = vsub.s32 0, %v559
      %v561 = vrot.slane %v340, %v560
      %v562 = vlaneseq
      %v563 = vshrl.u32 %v562, 7
      %v564 = vsub.s32 1, %v563
      %v565 = vrot.slane %v340, %v564
      %v568 = vadd.f32 %v555, %v561
      %v569 = vadd.f32 %v556, %v565
      %570 = vrot.lane.b32.xlu0 %v548, 126
      %v571 = vpop.permute.xlu0 %570
      %572 = vrot.lane.b32.xlu0 %v549, 126
      %v573 = vpop.permute.xlu0 %572
      %v574 = vsel %vm554, %v571, %v573
      %v575 = vsel %vm554, %v573, %v571
      %vm576 = vcmp.gt.f32.partialorder %v568, %v546
      %vm577 = vcmp.gt.f32.partialorder %v569, %v547
      %v578 = vsel %vm576, %v568, %v546
      %v579 = vsel %vm577, %v569, %v547
      %v580 = vsel %vm576, %v574, %v548
      %v581 = vsel %vm577, %v575, %v549
      %582 = vrot.lane.b32.xlu0 %v578, 124
      %v583 = vpop.permute.xlu0 %582
      %584 = vrot.lane.b32.xlu0 %v579, 124
      %v585 = vpop.permute.xlu0 %584
      %vm586 = vcmp.lt.s32.totalorder %v393, 124
      %v587 = vsel %vm586, %v583, %v585
      %v588 = vsel %vm586, %v585, %v583
      %v590 = vlaneseq
      %v591 = vshrl.u32 %v590, 7
      %v592 = vsub.s32 0, %v591
      %v593 = vrot.slane %v342, %v592
      %v594 = vlaneseq
      %v595 = vshrl.u32 %v594, 7
      %v596 = vsub.s32 1, %v595
      %v597 = vrot.slane %v342, %v596
      %v600 = vadd.f32 %v587, %v593
      %v601 = vadd.f32 %v588, %v597
      %602 = vrot.lane.b32.xlu0 %v580, 124
      %v603 = vpop.permute.xlu0 %602
      %604 = vrot.lane.b32.xlu0 %v581, 124
      %v605 = vpop.permute.xlu0 %604
      %v606 = vsel %vm586, %v603, %v605
      %v607 = vsel %vm586, %v605, %v603
      %vm608 = vcmp.gt.f32.partialorder %v600, %v578
      %vm609 = vcmp.gt.f32.partialorder %v601, %v579
      %v610 = vsel %vm608, %v600, %v578
      %v611 = vsel %vm609, %v601, %v579
      %v612 = vsel %vm608, %v606, %v580
      %v613 = vsel %vm609, %v607, %v581
      %614 = vrot.lane.b32.xlu0 %v610, 120
      %v615 = vpop.permute.xlu0 %614
      %616 = vrot.lane.b32.xlu0 %v611, 120
      %v617 = vpop.permute.xlu0 %616
      %vm618 = vcmp.lt.s32.totalorder %v393, 120
      %v619 = vsel %vm618, %v615, %v617
      %v620 = vsel %vm618, %v617, %v615
      %v622 = vlaneseq
      %v623 = vshrl.u32 %v622, 7
      %v624 = vsub.s32 0, %v623
      %v625 = vrot.slane %v344, %v624
      %v626 = vlaneseq
      %v627 = vshrl.u32 %v626, 7
      %v628 = vsub.s32 1, %v627
      %v629 = vrot.slane %v344, %v628
      %v632 = vadd.f32 %v619, %v625
      %v633 = vadd.f32 %v620, %v629
      %634 = vrot.lane.b32.xlu0 %v612, 120
      %v635 = vpop.permute.xlu0 %634
      %636 = vrot.lane.b32.xlu0 %v613, 120
      %v637 = vpop.permute.xlu0 %636
      %v638 = vsel %vm618, %v635, %v637
      %v639 = vsel %vm618, %v637, %v635
      %vm640 = vcmp.gt.f32.partialorder %v632, %v610
      %vm641 = vcmp.gt.f32.partialorder %v633, %v611
      %v642 = vsel %vm640, %v632, %v610
      %v643 = vsel %vm641, %v633, %v611
      %v644 = vsel %vm640, %v638, %v612
      %v645 = vsel %vm641, %v639, %v613
      %v646 = vsel %vm383, %v642, %v514
      %v647 = vsel %vm383, %v643, %v515
      %v648 = vsel %vm383, %v644, %v516
      %v649 = vsel %vm383, %v645, %v517
      %650 = vrot.lane.b32.xlu0 %v646, 16
      %v651 = vpop.permute.xlu0 %650
      %652 = vrot.lane.b32.xlu0 %v647, 16
      %v653 = vpop.permute.xlu0 %652
      %vm654 = vcmp.lt.s32.totalorder %v393, 16
      %v655 = vsel %vm654, %v651, %v653
      %v656 = vsel %vm654, %v653, %v651
      %v658 = vlaneseq
      %v659 = vshrl.u32 %v658, 7
      %v660 = vsub.s32 0, %v659
      %v661 = vrot.slane %v346, %v660
      %v662 = vlaneseq
      %v663 = vshrl.u32 %v662, 7
      %v664 = vsub.s32 1, %v663
      %v665 = vrot.slane %v346, %v664
      %v668 = vadd.f32 %v656, %v661
      %v669 = vadd.f32 %v655, %v665
      %670 = vrot.lane.b32.xlu0 %v648, 16
      %v671 = vpop.permute.xlu0 %670
      %672 = vrot.lane.b32.xlu0 %v649, 16
      %v673 = vpop.permute.xlu0 %672
      %v674 = vsel %vm654, %v671, %v673
      %v675 = vsel %vm654, %v673, %v671
      %vm676 = vcmp.gt.f32.partialorder %v668, %v646
      %vm677 = vcmp.gt.f32.partialorder %v669, %v647
      %v678 = vsel %vm676, %v668, %v646
      %v679 = vsel %vm677, %v669, %v647
      %v680 = vsel %vm676, %v675, %v648
      %v681 = vsel %vm677, %v674, %v649
      %682 = vrot.lane.b32.xlu0 %v678, 32
      %v683 = vpop.permute.xlu0 %682
      %684 = vrot.lane.b32.xlu0 %v679, 32
      %v685 = vpop.permute.xlu0 %684
      %vm686 = vcmp.lt.s32.totalorder %v393, 32
      %v687 = vsel %vm686, %v683, %v685
      %v688 = vsel %vm686, %v685, %v683
      %v690 = vlaneseq
      %v691 = vshrl.u32 %v690, 7
      %v692 = vsub.s32 0, %v691
      %v693 = vrot.slane %v348, %v692
      %v694 = vlaneseq
      %v695 = vshrl.u32 %v694, 7
      %v696 = vsub.s32 1, %v695
      %v697 = vrot.slane %v348, %v696
      %v700 = vadd.f32 %v688, %v693
      %v701 = vadd.f32 %v687, %v697
      %702 = vrot.lane.b32.xlu0 %v680, 32
      %v703 = vpop.permute.xlu0 %702
      %704 = vrot.lane.b32.xlu0 %v681, 32
      %v705 = vpop.permute.xlu0 %704
      %v706 = vsel %vm686, %v703, %v705
      %v707 = vsel %vm686, %v705, %v703
      %vm708 = vcmp.gt.f32.partialorder %v700, %v678
      %vm709 = vcmp.gt.f32.partialorder %v701, %v679
      %v710 = vsel %vm708, %v700, %v678
      %v711 = vsel %vm709, %v701, %v679
      %v712 = vsel %vm708, %v707, %v680
      %v713 = vsel %vm709, %v706, %v681
      %714 = vrot.lane.b32.xlu0 %v710, 64
      %v715 = vpop.permute.xlu0 %714
      %716 = vrot.lane.b32.xlu0 %v711, 64
      %v717 = vpop.permute.xlu0 %716
      %vm718 = vcmp.lt.s32.totalorder %v393, 64
      %v719 = vsel %vm718, %v715, %v717
      %v720 = vsel %vm718, %v717, %v715
      %v722 = vlaneseq
      %v723 = vshrl.u32 %v722, 7
      %v724 = vsub.s32 0, %v723
      %v725 = vrot.slane %v350, %v724
      %v726 = vlaneseq
      %v727 = vshrl.u32 %v726, 7
      %v728 = vsub.s32 1, %v727
      %v729 = vrot.slane %v350, %v728
      %v732 = vadd.f32 %v720, %v725
      %v733 = vadd.f32 %v719, %v729
      %734 = vrot.lane.b32.xlu0 %v712, 64
      %v735 = vpop.permute.xlu0 %734
      %736 = vrot.lane.b32.xlu0 %v713, 64
      %v737 = vpop.permute.xlu0 %736
      %v738 = vsel %vm718, %v735, %v737
      %v739 = vsel %vm718, %v737, %v735
      %vm740 = vcmp.gt.f32.partialorder %v732, %v710
      %vm741 = vcmp.gt.f32.partialorder %v733, %v711
      %v742 = vsel %vm740, %v732, %v710
      %v743 = vsel %vm741, %v733, %v711
      %v744 = vsel %vm740, %v739, %v712
      %v745 = vsel %vm741, %v738, %v713
      %v747 = vlaneseq
      %v748 = vshrl.u32 %v747, 7
      %v749 = vsub.s32 0, %v748
      %v750 = vrot.slane %v352, %v749
      %v751 = vlaneseq
      %v752 = vshrl.u32 %v751, 7
      %v753 = vsub.s32 1, %v752
      %v754 = vrot.slane %v352, %v753
      %v757 = vadd.f32 %v743, %v750
      %v758 = vadd.f32 %v742, %v754
      %vm759 = vcmp.gt.f32.partialorder %v757, %v742
      %vm760 = vcmp.gt.f32.partialorder %v758, %v743
      %v761 = vsel %vm759, %v745, %v744
      %v762 = vsel %vm760, %v744, %v745
      %763 = vrot.lane.b32.xlu0 %v646, 112
      %v764 = vpop.permute.xlu0 %763
      %765 = vrot.lane.b32.xlu0 %v647, 112
      %v766 = vpop.permute.xlu0 %765
      %vm767 = vcmp.lt.s32.totalorder %v393, 112
      %v768 = vsel %vm767, %v764, %v766
      %v769 = vsel %vm767, %v766, %v764
      %v771 = vlaneseq
      %v772 = vshrl.u32 %v771, 7
      %v773 = vsub.s32 0, %v772
      %v774 = vrot.slane %v354, %v773
      %v775 = vlaneseq
      %v776 = vshrl.u32 %v775, 7
      %v777 = vsub.s32 1, %v776
      %v778 = vrot.slane %v354, %v777
      %v781 = vadd.f32 %v768, %v774
      %v782 = vadd.f32 %v769, %v778
      %783 = vrot.lane.b32.xlu0 %v648, 112
      %v784 = vpop.permute.xlu0 %783
      %785 = vrot.lane.b32.xlu0 %v649, 112
      %v786 = vpop.permute.xlu0 %785
      %v787 = vsel %vm767, %v784, %v786
      %v788 = vsel %vm767, %v786, %v784
      %vm789 = vcmp.gt.f32.partialorder %v781, %v646
      %vm790 = vcmp.gt.f32.partialorder %v782, %v647
      %v791 = vsel %vm789, %v781, %v646
      %v792 = vsel %vm790, %v782, %v647
      %v793 = vsel %vm789, %v787, %v648
      %v794 = vsel %vm790, %v788, %v649
      %795 = vrot.lane.b32.xlu0 %v791, 96
      %v796 = vpop.permute.xlu0 %795
      %797 = vrot.lane.b32.xlu0 %v792, 96
      %v798 = vpop.permute.xlu0 %797
      %vm799 = vcmp.lt.s32.totalorder %v393, 96
      %v800 = vsel %vm799, %v796, %v798
      %v801 = vsel %vm799, %v798, %v796
      %v803 = vlaneseq
      %v804 = vshrl.u32 %v803, 7
      %v805 = vsub.s32 0, %v804
      %v806 = vrot.slane %v356, %v805
      %v807 = vlaneseq
      %v808 = vshrl.u32 %v807, 7
      %v809 = vsub.s32 1, %v808
      %v810 = vrot.slane %v356, %v809
      %v813 = vadd.f32 %v800, %v806
      %v814 = vadd.f32 %v801, %v810
      %815 = vrot.lane.b32.xlu0 %v793, 96
      %v816 = vpop.permute.xlu0 %815
      %817 = vrot.lane.b32.xlu0 %v794, 96
      %v818 = vpop.permute.xlu0 %817
      %v819 = vsel %vm799, %v816, %v818
      %v820 = vsel %vm799, %v818, %v816
      %vm821 = vcmp.gt.f32.partialorder %v813, %v791
      %vm822 = vcmp.gt.f32.partialorder %v814, %v792
      %v823 = vsel %vm821, %v813, %v791
      %v824 = vsel %vm822, %v814, %v792
      %v825 = vsel %vm821, %v819, %v793
      %v826 = vsel %vm822, %v820, %v794
      %827 = vrot.lane.b32.xlu0 %v823, 64
      %v828 = vpop.permute.xlu0 %827
      %829 = vrot.lane.b32.xlu0 %v824, 64
      %v830 = vpop.permute.xlu0 %829
      %v831 = vsel %vm718, %v828, %v830
      %v832 = vsel %vm718, %v830, %v828
      %v834 = vlaneseq
      %v835 = vshrl.u32 %v834, 7
      %v836 = vsub.s32 0, %v835
      %v837 = vrot.slane %v358, %v836
      %v838 = vlaneseq
      %v839 = vshrl.u32 %v838, 7
      %v840 = vsub.s32 1, %v839
      %v841 = vrot.slane %v358, %v840
      %v844 = vadd.f32 %v831, %v837
      %v845 = vadd.f32 %v832, %v841
      %846 = vrot.lane.b32.xlu0 %v825, 64
      %v847 = vpop.permute.xlu0 %846
      %848 = vrot.lane.b32.xlu0 %v826, 64
      %v849 = vpop.permute.xlu0 %848
      %v850 = vsel %vm718, %v847, %v849
      %v851 = vsel %vm718, %v849, %v847
      %vm852 = vcmp.gt.f32.partialorder %v844, %v823
      %vm853 = vcmp.gt.f32.partialorder %v845, %v824
      %v854 = vsel %vm852, %v844, %v823
      %v855 = vsel %vm853, %v845, %v824
      %v856 = vsel %vm852, %v850, %v825
      %v857 = vsel %vm853, %v851, %v826
      %v859 = vlaneseq
      %v860 = vshrl.u32 %v859, 7
      %v861 = vsub.s32 0, %v860
      %v862 = vrot.slane %v360, %v861
      %v863 = vlaneseq
      %v864 = vshrl.u32 %v863, 7
      %v865 = vsub.s32 1, %v864
      %v866 = vrot.slane %v360, %v865
      %v869 = vadd.f32 %v855, %v862
      %v870 = vadd.f32 %v854, %v866
      %vm871 = vcmp.gt.f32.partialorder %v869, %v854
      %vm872 = vcmp.gt.f32.partialorder %v870, %v855
      %v873 = vsel %vm871, %v857, %v856
      %v874 = vsel %vm872, %v856, %v857
      %v875 = vsel %vm387, %v873, %v761
      %v876 = vsel %vm387, %v874, %v762
      %877 = vrot.lane.b32.xlu0 %v875, 17
      %v878 = vpop.permute.xlu0 %877
      %879 = vrot.lane.b32.xlu0 %v876, 17
      %v880 = vpop.permute.xlu0 %879
      %vm881 = vcmp.lt.s32.totalorder %v393, 17
      %v882 = vsel %vm881, %v878, %v880
      %v883 = vsel %vm881, %v880, %v878
      %v885 = vlaneseq
      %v886 = vshrl.u32 %v885, 7
      %v887 = vsub.s32 0, %v886
      %v888 = vrot.slane %v362, %v887
      %v889 = vlaneseq
      %v890 = vshrl.u32 %v889, 7
      %v891 = vsub.s32 1, %v890
      %v892 = vrot.slane %v362, %v891
      %v895 = vmul.f32 %v883, %v888
      %v896 = vmul.f32 %v882, %v892
      %897 = vrot.lane.b32.xlu0 %v875, 16
      %v898 = vpop.permute.xlu0 %897
      %899 = vrot.lane.b32.xlu0 %v876, 16
      %v900 = vpop.permute.xlu0 %899
      %v901 = vsel %vm654, %v898, %v900
      %v902 = vsel %vm654, %v900, %v898
      %v904 = vlaneseq
      %v905 = vshrl.u32 %v904, 7
      %v906 = vsub.s32 0, %v905
      %v907 = vrot.slane %v364, %v906
      %v908 = vlaneseq
      %v909 = vshrl.u32 %v908, 7
      %v910 = vsub.s32 1, %v909
      %v911 = vrot.slane %v364, %v910
      %v914 = vmul.f32 %v902, %v907
      %v915 = vmul.f32 %v901, %v911
      %916 = vrot.lane.b32.xlu0 %v875, 15
      %v917 = vpop.permute.xlu0 %916
      %918 = vrot.lane.b32.xlu0 %v876, 15
      %v919 = vpop.permute.xlu0 %918
      %vm920 = vcmp.lt.s32.totalorder %v393, 15
      %v921 = vsel %vm920, %v917, %v919
      %v922 = vsel %vm920, %v919, %v917
      %v924 = vlaneseq
      %v925 = vshrl.u32 %v924, 7
      %v926 = vsub.s32 0, %v925
      %v927 = vrot.slane %v366, %v926
      %v928 = vlaneseq
      %v929 = vshrl.u32 %v928, 7
      %v930 = vsub.s32 1, %v929
      %v931 = vrot.slane %v366, %v930
      %v934 = vmul.f32 %v922, %v927
      %v935 = vmul.f32 %v921, %v931
      %v936 = vld [vmem:[%s4] sm:$0xff]
      %937 = vrot.lane.b32.xlu0 %v875, 1
      %v938 = vpop.permute.xlu0 %937
      %939 = vrot.lane.b32.xlu0 %v876, 1
      %v940 = vpop.permute.xlu0 %939
      %v941 = vsel %vm394, %v938, %v940
      %v942 = vsel %vm394, %v940, %v938
      %v944 = vlaneseq
      %v945 = vshrl.u32 %v944, 7
      %v946 = vsub.s32 0, %v945
      %v947 = vrot.slane %v368, %v946
      %v948 = vlaneseq
      %v949 = vshrl.u32 %v948, 7
      %v950 = vsub.s32 1, %v949
      %v951 = vrot.slane %v368, %v950
      %v954 = vmul.f32 %v942, %v947
      %v955 = vmul.f32 %v941, %v951
      %956 = vrot.lane.b32.xlu0 %v875, 127
      %v957 = vpop.permute.xlu0 %956
      %958 = vrot.lane.b32.xlu0 %v876, 127
      %v959 = vpop.permute.xlu0 %958
      %v960 = vsel %vm522, %v957, %v959
      %v961 = vsel %vm522, %v959, %v957
      %v963 = vlaneseq
      %v964 = vshrl.u32 %v963, 7
      %v965 = vsub.s32 0, %v964
      %v966 = vrot.slane %v370, %v965
      %v967 = vlaneseq
      %v968 = vshrl.u32 %v967, 7
      %v969 = vsub.s32 1, %v968
      %v970 = vrot.slane %v370, %v969
      %v973 = vmul.f32 %v960, %v966
      %v974 = vmul.f32 %v961, %v970
      %976 = vrot.lane.b32.xlu0 %v936, 104
      %v977 = vpop.permute.xlu0 %976
      %vm978 = vcmask 195584
      %v979 = vsel %vm978, %v977, 0
      %981 = vmatprep.subr.mxu0 0.0
      %982 = vmatpush1.msra.mxu0 0.0
      %983 = vmatprep.subr.mxu0 0.0
      %984 = vmatpush1.msra.mxu0 0.0
      %985 = vmatprep.subr.mxu0 0.0
      %986 = vmatpush1.msra.mxu0 0.0
      %987 = vmatprep.subr.mxu0 0.0
      %988 = vmatpush1.msra.mxu0 0.0
      %989 = vmatprep.subr.mxu0 0.0
      %990 = vmatpush1.msra.mxu0 0.0
      %991 = vmatprep.subr.mxu0 0.0
      %992 = vmatpush1.msra.mxu0 0.0
      %993 = vmatprep.subr.mxu0 0.0
      %994 = vmatpush1.msra.mxu0 0.0
      %995 = vmatprep.subr.mxu0 0.0
      %996 = vmatpush1.msra.mxu0 0.0
      %997 = vmatprep.subr.mxu0 0.0
      %998 = vmatpush1.msra.mxu0 0.0
      %999 = vmatprep.subr.mxu0 0.0
      %1000 = vmatpush1.msra.mxu0 0.0
      %1001 = vmatprep.subr.mxu0 0.0
      %1002 = vmatpush1.msra.mxu0 0.0
      %1003 = vmatprep.subr.mxu0 0.0
      %1004 = vmatpush1.msra.mxu0 0.0
      %1005 = vmatprep.subr.mxu0 0.0
      %1006 = vmatpush1.msra.mxu0 0.0
      %1007 = vmatprep.subr.mxu0 %v974
      %1008 = vmatpush1.msra.mxu0 %v973
      %1009 = vmatprep.subr.mxu0 %v876
      %1010 = vmatpush1.msra.mxu0 %v875
      %1011 = vmatprep.subr.mxu0 %v955
      %1012 = vmatpush1.msra.mxu0 %v954
      %1013 = vmatprep.subr.mxu0 0.0
      %1014 = vmatpush2.msra.mxu0 0.0
      %1015 = vmatprep.subr.mxu0 0.0
      %1016 = vmatpush2.msra.mxu0 0.0
      %1017 = vmatprep.subr.mxu0 0.0
      %1018 = vmatpush2.msra.mxu0 0.0
      %1019 = vmatprep.subr.mxu0 0.0
      %1020 = vmatpush2.msra.mxu0 0.0
      %1021 = vmatprep.subr.mxu0 0.0
      %1022 = vmatpush2.msra.mxu0 0.0
      %1023 = vmatprep.subr.mxu0 0.0
      %1024 = vmatpush2.msra.mxu0 0.0
      %1025 = vmatprep.subr.mxu0 0.0
      %1026 = vmatpush2.msra.mxu0 0.0
      %1027 = vmatprep.subr.mxu0 0.0
      %1028 = vmatpush2.msra.mxu0 0.0
      %1029 = vmatprep.subr.mxu0 0.0
      %1030 = vmatpush2.msra.mxu0 0.0
      %1031 = vmatprep.subr.mxu0 0.0
      %1032 = vmatpush2.msra.mxu0 0.0
      %1033 = vmatprep.subr.mxu0 0.0
      %1034 = vmatpush2.msra.mxu0 0.0
      %1035 = vmatprep.subr.mxu0 0.0
      %1036 = vmatpush2.msra.mxu0 0.0
      %1037 = vmatprep.subr.mxu0 0.0
      %1038 = vmatpush2.msra.mxu0 0.0
      %1039 = vmatprep.subr.mxu0 0.0
      %1040 = vmatpush2.msra.mxu0 0.0
      %1041 = vmatprep.subr.mxu0 0.0
      %1042 = vmatpush2.msra.mxu0 0.0
      %1043 = vmatprep.subr.mxu0 0.0
      %1044 = vmatpush2.msra.mxu0 0.0
      %1045 = vmatprep.mubr.f32.mxu0 0.0
      %1046 = vmatmul.mubr.f32.gmra.mxu0 %v979
      %v1047 = vpop.f32.mrf.mxu0
      %v1048 = vadd.f32 0.0, %v1047
      %v1049 = vpop.f32.mrf.mxu0
      %v1050 = vadd.f32 0.0, %v1049
      %1051 = vdwg.mxu0
      %v1052 = vsel %vm978, %v936, 0
      %1054 = vmatprep.subr.mxu0 0.0
      %1055 = vmatpush1.msra.mxu0 0.0
      %1056 = vmatprep.subr.mxu0 0.0
      %1057 = vmatpush1.msra.mxu0 0.0
      %1058 = vmatprep.subr.mxu0 0.0
      %1059 = vmatpush1.msra.mxu0 0.0
      %1060 = vmatprep.subr.mxu0 0.0
      %1061 = vmatpush1.msra.mxu0 0.0
      %1062 = vmatprep.subr.mxu0 0.0
      %1063 = vmatpush1.msra.mxu0 0.0
      %1064 = vmatprep.subr.mxu0 0.0
      %1065 = vmatpush1.msra.mxu0 0.0
      %1066 = vmatprep.subr.mxu0 0.0
      %1067 = vmatpush1.msra.mxu0 0.0
      %1068 = vmatprep.subr.mxu0 0.0
      %1069 = vmatpush1.msra.mxu0 0.0
      %1070 = vmatprep.subr.mxu0 0.0
      %1071 = vmatpush1.msra.mxu0 0.0
      %1072 = vmatprep.subr.mxu0 0.0
      %1073 = vmatpush1.msra.mxu0 0.0
      %1074 = vmatprep.subr.mxu0 0.0
      %1075 = vmatpush1.msra.mxu0 0.0
      %1076 = vmatprep.subr.mxu0 0.0
      %1077 = vmatpush1.msra.mxu0 0.0
      %1078 = vmatprep.subr.mxu0 0.0
      %1079 = vmatpush1.msra.mxu0 0.0
      %1080 = vmatprep.subr.mxu0 %v935
      %1081 = vmatpush1.msra.mxu0 %v934
      %1082 = vmatprep.subr.mxu0 %v915
      %1083 = vmatpush1.msra.mxu0 %v914
      %1084 = vmatprep.subr.mxu0 %v896
      %1085 = vmatpush1.msra.mxu0 %v895
      %1086 = vmatprep.subr.mxu0 0.0
      %1087 = vmatpush2.msra.mxu0 0.0
      %1088 = vmatprep.subr.mxu0 0.0
      %1089 = vmatpush2.msra.mxu0 0.0
      %1090 = vmatprep.subr.mxu0 0.0
      %1091 = vmatpush2.msra.mxu0 0.0
      %1092 = vmatprep.subr.mxu0 0.0
      %1093 = vmatpush2.msra.mxu0 0.0
      %1094 = vmatprep.subr.mxu0 0.0
      %1095 = vmatpush2.msra.mxu0 0.0
      %1096 = vmatprep.subr.mxu0 0.0
      %1097 = vmatpush2.msra.mxu0 0.0
      %1098 = vmatprep.subr.mxu0 0.0
      %1099 = vmatpush2.msra.mxu0 0.0
      %1100 = vmatprep.subr.mxu0 0.0
      %1101 = vmatpush2.msra.mxu0 0.0
      %1102 = vmatprep.subr.mxu0 0.0
      %1103 = vmatpush2.msra.mxu0 0.0
      %1104 = vmatprep.subr.mxu0 0.0
      %1105 = vmatpush2.msra.mxu0 0.0
      %1106 = vmatprep.subr.mxu0 0.0
      %1107 = vmatpush2.msra.mxu0 0.0
      %1108 = vmatprep.subr.mxu0 0.0
      %1109 = vmatpush2.msra.mxu0 0.0
      %1110 = vmatprep.subr.mxu0 0.0
      %1111 = vmatpush2.msra.mxu0 0.0
      %1112 = vmatprep.subr.mxu0 0.0
      %1113 = vmatpush2.msra.mxu0 0.0
      %1114 = vmatprep.subr.mxu0 0.0
      %1115 = vmatpush2.msra.mxu0 0.0
      %1116 = vmatprep.subr.mxu0 0.0
      %1117 = vmatpush2.msra.mxu0 0.0
      %1118 = vmatprep.mubr.f32.mxu0 0.0
      %1119 = vmatmul.mubr.f32.gmra.mxu0 %v1052
      %v1120 = vpop.f32.mrf.mxu0
      %v1121 = vadd.f32 %v1048, %v1120
      %v1122 = vpop.f32.mrf.mxu0
      %v1123 = vadd.f32 %v1050, %v1122
      %1124 = vdwg.mxu0
      %1125 = vrot.lane.b32.xlu0 %v875, 113
      %v1126 = vpop.permute.xlu0 %1125
      %1127 = vrot.lane.b32.xlu0 %v876, 113
      %v1128 = vpop.permute.xlu0 %1127
      %vm1129 = vcmp.lt.s32.totalorder %v393, 113
      %v1130 = vsel %vm1129, %v1126, %v1128
      %v1131 = vsel %vm1129, %v1128, %v1126
      %v1133 = vlaneseq
      %v1134 = vshrl.u32 %v1133, 7
      %v1135 = vsub.s32 0, %v1134
      %v1136 = vrot.slane %v372, %v1135
      %v1137 = vlaneseq
      %v1138 = vshrl.u32 %v1137, 7
      %v1139 = vsub.s32 1, %v1138
      %v1140 = vrot.slane %v372, %v1139
      %v1143 = vmul.f32 %v1130, %v1136
      %v1144 = vmul.f32 %v1131, %v1140
      %1145 = vrot.lane.b32.xlu0 %v875, 112
      %v1146 = vpop.permute.xlu0 %1145
      %1147 = vrot.lane.b32.xlu0 %v876, 112
      %v1148 = vpop.permute.xlu0 %1147
      %v1149 = vsel %vm767, %v1146, %v1148
      %v1150 = vsel %vm767, %v1148, %v1146
      %v1152 = vlaneseq
      %v1153 = vshrl.u32 %v1152, 7
      %v1154 = vsub.s32 0, %v1153
      %v1155 = vrot.slane %v374, %v1154
      %v1156 = vlaneseq
      %v1157 = vshrl.u32 %v1156, 7
      %v1158 = vsub.s32 1, %v1157
      %v1159 = vrot.slane %v374, %v1158
      %v1162 = vmul.f32 %v1149, %v1155
      %v1163 = vmul.f32 %v1150, %v1159
      %1164 = vrot.lane.b32.xlu0 %v875, 111
      %v1165 = vpop.permute.xlu0 %1164
      %1166 = vrot.lane.b32.xlu0 %v876, 111
      %v1167 = vpop.permute.xlu0 %1166
      %vm1168 = vcmp.lt.s32.totalorder %v393, 111
      %v1169 = vsel %vm1168, %v1165, %v1167
      %v1170 = vsel %vm1168, %v1167, %v1165
      %v1172 = vlaneseq
      %v1173 = vshrl.u32 %v1172, 7
      %v1174 = vsub.s32 0, %v1173
      %v1175 = vrot.slane %v376, %v1174
      %v1176 = vlaneseq
      %v1177 = vshrl.u32 %v1176, 7
      %v1178 = vsub.s32 1, %v1177
      %v1179 = vrot.slane %v376, %v1178
      %v1182 = vmul.f32 %v1169, %v1175
      %v1183 = vmul.f32 %v1170, %v1179
      %1184 = vrot.lane.b32.xlu0 %v936, 80
      %v1185 = vpop.permute.xlu0 %1184
      %v1186 = vsel %vm978, %v1185, 0
      %1188 = vmatprep.subr.mxu0 0.0
      %1189 = vmatpush1.msra.mxu0 0.0
      %1190 = vmatprep.subr.mxu0 0.0
      %1191 = vmatpush1.msra.mxu0 0.0
      %1192 = vmatprep.subr.mxu0 0.0
      %1193 = vmatpush1.msra.mxu0 0.0
      %1194 = vmatprep.subr.mxu0 0.0
      %1195 = vmatpush1.msra.mxu0 0.0
      %1196 = vmatprep.subr.mxu0 0.0
      %1197 = vmatpush1.msra.mxu0 0.0
      %1198 = vmatprep.subr.mxu0 0.0
      %1199 = vmatpush1.msra.mxu0 0.0
      %1200 = vmatprep.subr.mxu0 0.0
      %1201 = vmatpush1.msra.mxu0 0.0
      %1202 = vmatprep.subr.mxu0 0.0
      %1203 = vmatpush1.msra.mxu0 0.0
      %1204 = vmatprep.subr.mxu0 0.0
      %1205 = vmatpush1.msra.mxu0 0.0
      %1206 = vmatprep.subr.mxu0 0.0
      %1207 = vmatpush1.msra.mxu0 0.0
      %1208 = vmatprep.subr.mxu0 0.0
      %1209 = vmatpush1.msra.mxu0 0.0
      %1210 = vmatprep.subr.mxu0 0.0
      %1211 = vmatpush1.msra.mxu0 0.0
      %1212 = vmatprep.subr.mxu0 0.0
      %1213 = vmatpush1.msra.mxu0 0.0
      %1214 = vmatprep.subr.mxu0 %v1183
      %1215 = vmatpush1.msra.mxu0 %v1182
      %1216 = vmatprep.subr.mxu0 %v1163
      %1217 = vmatpush1.msra.mxu0 %v1162
      %1218 = vmatprep.subr.mxu0 %v1144
      %1219 = vmatpush1.msra.mxu0 %v1143
      %1220 = vmatprep.subr.mxu0 0.0
      %1221 = vmatpush2.msra.mxu0 0.0
      %1222 = vmatprep.subr.mxu0 0.0
      %1223 = vmatpush2.msra.mxu0 0.0
      %1224 = vmatprep.subr.mxu0 0.0
      %1225 = vmatpush2.msra.mxu0 0.0
      %1226 = vmatprep.subr.mxu0 0.0
      %1227 = vmatpush2.msra.mxu0 0.0
      %1228 = vmatprep.subr.mxu0 0.0
      %1229 = vmatpush2.msra.mxu0 0.0
      %1230 = vmatprep.subr.mxu0 0.0
      %1231 = vmatpush2.msra.mxu0 0.0
      %1232 = vmatprep.subr.mxu0 0.0
      %1233 = vmatpush2.msra.mxu0 0.0
      %1234 = vmatprep.subr.mxu0 0.0
      %1235 = vmatpush2.msra.mxu0 0.0
      %1236 = vmatprep.subr.mxu0 0.0
      %1237 = vmatpush2.msra.mxu0 0.0
      %1238 = vmatprep.subr.mxu0 0.0
      %1239 = vmatpush2.msra.mxu0 0.0
      %1240 = vmatprep.subr.mxu0 0.0
      %1241 = vmatpush2.msra.mxu0 0.0
      %1242 = vmatprep.subr.mxu0 0.0
      %1243 = vmatpush2.msra.mxu0 0.0
      %1244 = vmatprep.subr.mxu0 0.0
      %1245 = vmatpush2.msra.mxu0 0.0
      %1246 = vmatprep.subr.mxu0 0.0
      %1247 = vmatpush2.msra.mxu0 0.0
      %1248 = vmatprep.subr.mxu0 0.0
      %1249 = vmatpush2.msra.mxu0 0.0
      %1250 = vmatprep.subr.mxu0 0.0
      %1251 = vmatpush2.msra.mxu0 0.0
      %1252 = vmatprep.mubr.f32.mxu0 0.0
      %1253 = vmatmul.mubr.f32.gmra.mxu0 %v1186
      %v1254 = vpop.f32.mrf.mxu0
      %v1255 = vadd.f32 0.0, %v1254
      %v1256 = vpop.f32.mrf.mxu0
      %v1257 = vadd.f32 0.0, %v1256
      %1258 = vdwg.mxu0
      %v1259 = vadd.f32 %v1121, %v1255
      %v1260 = vadd.f32 %v1123, %v1257
      %v1261 = vld [vmem:[%s5] sm:$0xff]
      %1263 = vset.pattern.permute.xlu0 0
      %1264 = vperm.xlu0 %1263, %v1261
      %v1265 = vpop.permute.xlu0 %1264
      %v1267 = vadd.f32 %v1259, %v1265
      %v1268 = vadd.f32 %v1260, %v1265
      %1269 = vrot.lane.b32.xlu0 %v1267, 1
      %v1270 = vpop.permute.xlu0 %1269
      %1271 = vrot.lane.b32.xlu0 %v1268, 1
      %v1272 = vpop.permute.xlu0 %1271
      %v1273 = vsel %vm394, %v1270, %v1272
      %v1274 = vsel %vm394, %v1272, %v1270
      %v1275 = vsel %vm416, %v1274, %v1267
      %v1276 = vsel %vm417, %v1273, %v1268
      %1277 = vrot.lane.b32.xlu0 %v1275, 2
      %v1278 = vpop.permute.xlu0 %1277
      %1279 = vrot.lane.b32.xlu0 %v1276, 2
      %v1280 = vpop.permute.xlu0 %1279
      %v1281 = vsel %vm426, %v1278, %v1280
      %v1282 = vsel %vm426, %v1280, %v1278
      %v1283 = vsel %vm448, %v1282, %v1275
      %v1284 = vsel %vm449, %v1281, %v1276
      %1285 = vrot.lane.b32.xlu0 %v1283, 4
      %v1286 = vpop.permute.xlu0 %1285
      %1287 = vrot.lane.b32.xlu0 %v1284, 4
      %v1288 = vpop.permute.xlu0 %1287
      %v1289 = vsel %vm458, %v1286, %v1288
      %v1290 = vsel %vm458, %v1288, %v1286
      %v1291 = vsel %vm480, %v1290, %v1283
      %v1292 = vsel %vm481, %v1289, %v1284
      %1293 = vrot.lane.b32.xlu0 %v1291, 8
      %v1294 = vpop.permute.xlu0 %1293
      %1295 = vrot.lane.b32.xlu0 %v1292, 8
      %v1296 = vpop.permute.xlu0 %1295
      %v1297 = vsel %vm490, %v1294, %v1296
      %v1298 = vsel %vm490, %v1296, %v1294
      %v1299 = vsel %vm512, %v1298, %v1291
      %v1300 = vsel %vm513, %v1297, %v1292
      %1301 = vrot.lane.b32.xlu0 %v1267, 127
      %v1302 = vpop.permute.xlu0 %1301
      %1303 = vrot.lane.b32.xlu0 %v1268, 127
      %v1304 = vpop.permute.xlu0 %1303
      %v1305 = vsel %vm522, %v1302, %v1304
      %v1306 = vsel %vm522, %v1304, %v1302
      %v1307 = vsel %vm544, %v1305, %v1267
      %v1308 = vsel %vm545, %v1306, %v1268
      %1309 = vrot.lane.b32.xlu0 %v1307, 126
      %v1310 = vpop.permute.xlu0 %1309
      %1311 = vrot.lane.b32.xlu0 %v1308, 126
      %v1312 = vpop.permute.xlu0 %1311
      %v1313 = vsel %vm554, %v1310, %v1312
      %v1314 = vsel %vm554, %v1312, %v1310
      %v1315 = vsel %vm576, %v1313, %v1307
      %v1316 = vsel %vm577, %v1314, %v1308
      %1317 = vrot.lane.b32.xlu0 %v1315, 124
      %v1318 = vpop.permute.xlu0 %1317
      %1319 = vrot.lane.b32.xlu0 %v1316, 124
      %v1320 = vpop.permute.xlu0 %1319
      %v1321 = vsel %vm586, %v1318, %v1320
      %v1322 = vsel %vm586, %v1320, %v1318
      %v1323 = vsel %vm608, %v1321, %v1315
      %v1324 = vsel %vm609, %v1322, %v1316
      %1325 = vrot.lane.b32.xlu0 %v1323, 120
      %v1326 = vpop.permute.xlu0 %1325
      %1327 = vrot.lane.b32.xlu0 %v1324, 120
      %v1328 = vpop.permute.xlu0 %1327
      %v1329 = vsel %vm618, %v1326, %v1328
      %v1330 = vsel %vm618, %v1328, %v1326
      %v1331 = vsel %vm640, %v1329, %v1323
      %v1332 = vsel %vm641, %v1330, %v1324
      %v1333 = vsel %vm383, %v1331, %v1299
      %v1334 = vsel %vm383, %v1332, %v1300
      %1335 = vrot.lane.b32.xlu0 %v1333, 16
      %v1336 = vpop.permute.xlu0 %1335
      %1337 = vrot.lane.b32.xlu0 %v1334, 16
      %v1338 = vpop.permute.xlu0 %1337
      %v1339 = vsel %vm654, %v1336, %v1338
      %v1340 = vsel %vm654, %v1338, %v1336
      %v1341 = vsel %vm676, %v1340, %v1333
      %v1342 = vsel %vm677, %v1339, %v1334
      %1343 = vrot.lane.b32.xlu0 %v1341, 32
      %v1344 = vpop.permute.xlu0 %1343
      %1345 = vrot.lane.b32.xlu0 %v1342, 32
      %v1346 = vpop.permute.xlu0 %1345
      %v1347 = vsel %vm686, %v1344, %v1346
      %v1348 = vsel %vm686, %v1346, %v1344
      %v1349 = vsel %vm708, %v1348, %v1341
      %v1350 = vsel %vm709, %v1347, %v1342
      %1351 = vrot.lane.b32.xlu0 %v1349, 64
      %v1352 = vpop.permute.xlu0 %1351
      %1353 = vrot.lane.b32.xlu0 %v1350, 64
      %v1354 = vpop.permute.xlu0 %1353
      %v1355 = vsel %vm718, %v1352, %v1354
      %v1356 = vsel %vm718, %v1354, %v1352
      %v1357 = vsel %vm740, %v1356, %v1349
      %v1358 = vsel %vm741, %v1355, %v1350
      %v1359 = vsel %vm759, %v1358, %v1357
      %v1360 = vsel %vm760, %v1357, %v1358
      %1361 = vrot.lane.b32.xlu0 %v1333, 112
      %v1362 = vpop.permute.xlu0 %1361
      %1363 = vrot.lane.b32.xlu0 %v1334, 112
      %v1364 = vpop.permute.xlu0 %1363
      %v1365 = vsel %vm767, %v1362, %v1364
      %v1366 = vsel %vm767, %v1364, %v1362
      %v1367 = vsel %vm789, %v1365, %v1333
      %v1368 = vsel %vm790, %v1366, %v1334
      %1369 = vrot.lane.b32.xlu0 %v1367, 96
      %v1370 = vpop.permute.xlu0 %1369
      %1371 = vrot.lane.b32.xlu0 %v1368, 96
      %v1372 = vpop.permute.xlu0 %1371
      %v1373 = vsel %vm799, %v1370, %v1372
      %v1374 = vsel %vm799, %v1372, %v1370
      %v1375 = vsel %vm821, %v1373, %v1367
      %v1376 = vsel %vm822, %v1374, %v1368
      %1377 = vrot.lane.b32.xlu0 %v1375, 64
      %v1378 = vpop.permute.xlu0 %1377
      %1379 = vrot.lane.b32.xlu0 %v1376, 64
      %v1380 = vpop.permute.xlu0 %1379
      %v1381 = vsel %vm718, %v1378, %v1380
      %v1382 = vsel %vm718, %v1380, %v1378
      %v1383 = vsel %vm852, %v1381, %v1375
      %v1384 = vsel %vm853, %v1382, %v1376
      %v1385 = vsel %vm871, %v1384, %v1383
      %v1386 = vsel %vm872, %v1383, %v1384
      %v1387 = vsel %vm387, %v1385, %v1359
      %v1388 = vsel %vm387, %v1386, %v1360
      %1389 = vrot.lane.b32.xlu0 %v1387, 17
      %v1390 = vpop.permute.xlu0 %1389
      %1391 = vrot.lane.b32.xlu0 %v1388, 17
      %v1392 = vpop.permute.xlu0 %1391
      %v1393 = vsel %vm881, %v1390, %v1392
      %v1394 = vsel %vm881, %v1392, %v1390
      %v1395 = vmul.f32 %v1394, %v888
      %v1396 = vmul.f32 %v1393, %v892
      %1397 = vrot.lane.b32.xlu0 %v1387, 16
      %v1398 = vpop.permute.xlu0 %1397
      %1399 = vrot.lane.b32.xlu0 %v1388, 16
      %v1400 = vpop.permute.xlu0 %1399
      %v1401 = vsel %vm654, %v1398, %v1400
      %v1402 = vsel %vm654, %v1400, %v1398
      %v1403 = vmul.f32 %v1402, %v907
      %v1404 = vmul.f32 %v1401, %v911
      %1405 = vrot.lane.b32.xlu0 %v1387, 15
      %v1406 = vpop.permute.xlu0 %1405
      %1407 = vrot.lane.b32.xlu0 %v1388, 15
      %v1408 = vpop.permute.xlu0 %1407
      %v1409 = vsel %vm920, %v1406, %v1408
      %v1410 = vsel %vm920, %v1408, %v1406
      %v1411 = vmul.f32 %v1410, %v927
      %v1412 = vmul.f32 %v1409, %v931
      %v1413 = vld [vmem:[%s6] sm:$0xff]
      %1414 = vrot.lane.b32.xlu0 %v1387, 1
      %v1415 = vpop.permute.xlu0 %1414
      %1416 = vrot.lane.b32.xlu0 %v1388, 1
      %v1417 = vpop.permute.xlu0 %1416
      %v1418 = vsel %vm394, %v1415, %v1417
      %v1419 = vsel %vm394, %v1417, %v1415
      %v1420 = vmul.f32 %v1419, %v947
      %v1421 = vmul.f32 %v1418, %v951
      %1422 = vrot.lane.b32.xlu0 %v1387, 127
      %v1423 = vpop.permute.xlu0 %1422
      %1424 = vrot.lane.b32.xlu0 %v1388, 127
      %v1425 = vpop.permute.xlu0 %1424
      %v1426 = vsel %vm522, %v1423, %v1425
      %v1427 = vsel %vm522, %v1425, %v1423
      %v1428 = vmul.f32 %v1426, %v966
      %v1429 = vmul.f32 %v1427, %v970
      %1431 = vrot.lane.b32.xlu0 %v1413, 104
      %v1432 = vpop.permute.xlu0 %1431
      %v1433 = vsel %vm978, %v1432, 0
      %1435 = vmatprep.subr.mxu0 0.0
      %1436 = vmatpush1.msra.mxu0 0.0
      %1437 = vmatprep.subr.mxu0 0.0
      %1438 = vmatpush1.msra.mxu0 0.0
      %1439 = vmatprep.subr.mxu0 0.0
      %1440 = vmatpush1.msra.mxu0 0.0
      %1441 = vmatprep.subr.mxu0 0.0
      %1442 = vmatpush1.msra.mxu0 0.0
      %1443 = vmatprep.subr.mxu0 0.0
      %1444 = vmatpush1.msra.mxu0 0.0
      %1445 = vmatprep.subr.mxu0 0.0
      %1446 = vmatpush1.msra.mxu0 0.0
      %1447 = vmatprep.subr.mxu0 0.0
      %1448 = vmatpush1.msra.mxu0 0.0
      %1449 = vmatprep.subr.mxu0 0.0
      %1450 = vmatpush1.msra.mxu0 0.0
      %1451 = vmatprep.subr.mxu0 0.0
      %1452 = vmatpush1.msra.mxu0 0.0
      %1453 = vmatprep.subr.mxu0 0.0
      %1454 = vmatpush1.msra.mxu0 0.0
      %1455 = vmatprep.subr.mxu0 0.0
      %1456 = vmatpush1.msra.mxu0 0.0
      %1457 = vmatprep.subr.mxu0 0.0
      %1458 = vmatpush1.msra.mxu0 0.0
      %1459 = vmatprep.subr.mxu0 0.0
      %1460 = vmatpush1.msra.mxu0 0.0
      %1461 = vmatprep.subr.mxu0 %v1429
      %1462 = vmatpush1.msra.mxu0 %v1428
      %1463 = vmatprep.subr.mxu0 %v1388
      %1464 = vmatpush1.msra.mxu0 %v1387
      %1465 = vmatprep.subr.mxu0 %v1421
      %1466 = vmatpush1.msra.mxu0 %v1420
      %1467 = vmatprep.subr.mxu0 0.0
      %1468 = vmatpush2.msra.mxu0 0.0
      %1469 = vmatprep.subr.mxu0 0.0
      %1470 = vmatpush2.msra.mxu0 0.0
      %1471 = vmatprep.subr.mxu0 0.0
      %1472 = vmatpush2.msra.mxu0 0.0
      %1473 = vmatprep.subr.mxu0 0.0
      %1474 = vmatpush2.msra.mxu0 0.0
      %1475 = vmatprep.subr.mxu0 0.0
      %1476 = vmatpush2.msra.mxu0 0.0
      %1477 = vmatprep.subr.mxu0 0.0
      %1478 = vmatpush2.msra.mxu0 0.0
      %1479 = vmatprep.subr.mxu0 0.0
      %1480 = vmatpush2.msra.mxu0 0.0
      %1481 = vmatprep.subr.mxu0 0.0
      %1482 = vmatpush2.msra.mxu0 0.0
      %1483 = vmatprep.subr.mxu0 0.0
      %1484 = vmatpush2.msra.mxu0 0.0
      %1485 = vmatprep.subr.mxu0 0.0
      %1486 = vmatpush2.msra.mxu0 0.0
      %1487 = vmatprep.subr.mxu0 0.0
      %1488 = vmatpush2.msra.mxu0 0.0
      %1489 = vmatprep.subr.mxu0 0.0
      %1490 = vmatpush2.msra.mxu0 0.0
      %1491 = vmatprep.subr.mxu0 0.0
      %1492 = vmatpush2.msra.mxu0 0.0
      %1493 = vmatprep.subr.mxu0 0.0
      %1494 = vmatpush2.msra.mxu0 0.0
      %1495 = vmatprep.subr.mxu0 0.0
      %1496 = vmatpush2.msra.mxu0 0.0
      %1497 = vmatprep.subr.mxu0 0.0
      %1498 = vmatpush2.msra.mxu0 0.0
      %1499 = vmatprep.mubr.f32.mxu0 0.0
      %1500 = vmatmul.mubr.f32.gmra.mxu0 %v1433
      %v1501 = vpop.f32.mrf.mxu0
      %v1502 = vadd.f32 0.0, %v1501
      %v1503 = vpop.f32.mrf.mxu0
      %v1504 = vadd.f32 0.0, %v1503
      %1505 = vdwg.mxu0
      %v1506 = vsel %vm978, %v1413, 0
      %1508 = vmatprep.subr.mxu0 0.0
      %1509 = vmatpush1.msra.mxu0 0.0
      %1510 = vmatprep.subr.mxu0 0.0
      %1511 = vmatpush1.msra.mxu0 0.0
      %1512 = vmatprep.subr.mxu0 0.0
      %1513 = vmatpush1.msra.mxu0 0.0
      %1514 = vmatprep.subr.mxu0 0.0
      %1515 = vmatpush1.msra.mxu0 0.0
      %1516 = vmatprep.subr.mxu0 0.0
      %1517 = vmatpush1.msra.mxu0 0.0
      %1518 = vmatprep.subr.mxu0 0.0
      %1519 = vmatpush1.msra.mxu0 0.0
      %1520 = vmatprep.subr.mxu0 0.0
      %1521 = vmatpush1.msra.mxu0 0.0
      %1522 = vmatprep.subr.mxu0 0.0
      %1523 = vmatpush1.msra.mxu0 0.0
      %1524 = vmatprep.subr.mxu0 0.0
      %1525 = vmatpush1.msra.mxu0 0.0
      %1526 = vmatprep.subr.mxu0 0.0
      %1527 = vmatpush1.msra.mxu0 0.0
      %1528 = vmatprep.subr.mxu0 0.0
      %1529 = vmatpush1.msra.mxu0 0.0
      %1530 = vmatprep.subr.mxu0 0.0
      %1531 = vmatpush1.msra.mxu0 0.0
      %1532 = vmatprep.subr.mxu0 0.0
      %1533 = vmatpush1.msra.mxu0 0.0
      %1534 = vmatprep.subr.mxu0 %v1412
      %1535 = vmatpush1.msra.mxu0 %v1411
      %1536 = vmatprep.subr.mxu0 %v1404
      %1537 = vmatpush1.msra.mxu0 %v1403
      %1538 = vmatprep.subr.mxu0 %v1396
      %1539 = vmatpush1.msra.mxu0 %v1395
      %1540 = vmatprep.subr.mxu0 0.0
      %1541 = vmatpush2.msra.mxu0 0.0
      %1542 = vmatprep.subr.mxu0 0.0
      %1543 = vmatpush2.msra.mxu0 0.0
      %1544 = vmatprep.subr.mxu0 0.0
      %1545 = vmatpush2.msra.mxu0 0.0
      %1546 = vmatprep.subr.mxu0 0.0
      %1547 = vmatpush2.msra.mxu0 0.0
      %1548 = vmatprep.subr.mxu0 0.0
      %1549 = vmatpush2.msra.mxu0 0.0
      %1550 = vmatprep.subr.mxu0 0.0
      %1551 = vmatpush2.msra.mxu0 0.0
      %1552 = vmatprep.subr.mxu0 0.0
      %1553 = vmatpush2.msra.mxu0 0.0
      %1554 = vmatprep.subr.mxu0 0.0
      %1555 = vmatpush2.msra.mxu0 0.0
      %1556 = vmatprep.subr.mxu0 0.0
      %1557 = vmatpush2.msra.mxu0 0.0
      %1558 = vmatprep.subr.mxu0 0.0
      %1559 = vmatpush2.msra.mxu0 0.0
      %1560 = vmatprep.subr.mxu0 0.0
      %1561 = vmatpush2.msra.mxu0 0.0
      %1562 = vmatprep.subr.mxu0 0.0
      %1563 = vmatpush2.msra.mxu0 0.0
      %1564 = vmatprep.subr.mxu0 0.0
      %1565 = vmatpush2.msra.mxu0 0.0
      %1566 = vmatprep.subr.mxu0 0.0
      %1567 = vmatpush2.msra.mxu0 0.0
      %1568 = vmatprep.subr.mxu0 0.0
      %1569 = vmatpush2.msra.mxu0 0.0
      %1570 = vmatprep.subr.mxu0 0.0
      %1571 = vmatpush2.msra.mxu0 0.0
      %1572 = vmatprep.mubr.f32.mxu0 0.0
      %1573 = vmatmul.mubr.f32.gmra.mxu0 %v1506
      %v1574 = vpop.f32.mrf.mxu0
      %v1575 = vadd.f32 %v1502, %v1574
      %v1576 = vpop.f32.mrf.mxu0
      %v1577 = vadd.f32 %v1504, %v1576
      %1578 = vdwg.mxu0
      %1579 = vrot.lane.b32.xlu0 %v1387, 113
      %v1580 = vpop.permute.xlu0 %1579
      %1581 = vrot.lane.b32.xlu0 %v1388, 113
      %v1582 = vpop.permute.xlu0 %1581
      %v1583 = vsel %vm1129, %v1580, %v1582
      %v1584 = vsel %vm1129, %v1582, %v1580
      %v1585 = vmul.f32 %v1583, %v1136
      %v1586 = vmul.f32 %v1584, %v1140
      %1587 = vrot.lane.b32.xlu0 %v1387, 112
      %v1588 = vpop.permute.xlu0 %1587
      %1589 = vrot.lane.b32.xlu0 %v1388, 112
      %v1590 = vpop.permute.xlu0 %1589
      %v1591 = vsel %vm767, %v1588, %v1590
      %v1592 = vsel %vm767, %v1590, %v1588
      %v1593 = vmul.f32 %v1591, %v1155
      %v1594 = vmul.f32 %v1592, %v1159
      %1595 = vrot.lane.b32.xlu0 %v1387, 111
      %v1596 = vpop.permute.xlu0 %1595
      %1597 = vrot.lane.b32.xlu0 %v1388, 111
      %v1598 = vpop.permute.xlu0 %1597
      %v1599 = vsel %vm1168, %v1596, %v1598
      %v1600 = vsel %vm1168, %v1598, %v1596
      %v1601 = vmul.f32 %v1599, %v1175
      %v1602 = vmul.f32 %v1600, %v1179
      %1603 = vrot.lane.b32.xlu0 %v1413, 80
      %v1604 = vpop.permute.xlu0 %1603
      %v1605 = vsel %vm978, %v1604, 0
      %1607 = vmatprep.subr.mxu0 0.0
      %1608 = vmatpush1.msra.mxu0 0.0
      %1609 = vmatprep.subr.mxu0 0.0
      %1610 = vmatpush1.msra.mxu0 0.0
      %1611 = vmatprep.subr.mxu0 0.0
      %1612 = vmatpush1.msra.mxu0 0.0
      %1613 = vmatprep.subr.mxu0 0.0
      %1614 = vmatpush1.msra.mxu0 0.0
      %1615 = vmatprep.subr.mxu0 0.0
      %1616 = vmatpush1.msra.mxu0 0.0
      %1617 = vmatprep.subr.mxu0 0.0
      %1618 = vmatpush1.msra.mxu0 0.0
      %1619 = vmatprep.subr.mxu0 0.0
      %1620 = vmatpush1.msra.mxu0 0.0
      %1621 = vmatprep.subr.mxu0 0.0
      %1622 = vmatpush1.msra.mxu0 0.0
      %1623 = vmatprep.subr.mxu0 0.0
      %1624 = vmatpush1.msra.mxu0 0.0
      %1625 = vmatprep.subr.mxu0 0.0
      %1626 = vmatpush1.msra.mxu0 0.0
      %1627 = vmatprep.subr.mxu0 0.0
      %1628 = vmatpush1.msra.mxu0 0.0
      %1629 = vmatprep.subr.mxu0 0.0
      %1630 = vmatpush1.msra.mxu0 0.0
      %1631 = vmatprep.subr.mxu0 0.0
      %1632 = vmatpush1.msra.mxu0 0.0
      %1633 = vmatprep.subr.mxu0 %v1602
      %1634 = vmatpush1.msra.mxu0 %v1601
      %1635 = vmatprep.subr.mxu0 %v1594
      %1636 = vmatpush1.msra.mxu0 %v1593
      %1637 = vmatprep.subr.mxu0 %v1586
      %1638 = vmatpush1.msra.mxu0 %v1585
      %1639 = vmatprep.subr.mxu0 0.0
      %1640 = vmatpush2.msra.mxu0 0.0
      %1641 = vmatprep.subr.mxu0 0.0
      %1642 = vmatpush2.msra.mxu0 0.0
      %1643 = vmatprep.subr.mxu0 0.0
      %1644 = vmatpush2.msra.mxu0 0.0
      %1645 = vmatprep.subr.mxu0 0.0
      %1646 = vmatpush2.msra.mxu0 0.0
      %1647 = vmatprep.subr.mxu0 0.0
      %1648 = vmatpush2.msra.mxu0 0.0
      %1649 = vmatprep.subr.mxu0 0.0
      %1650 = vmatpush2.msra.mxu0 0.0
      %1651 = vmatprep.subr.mxu0 0.0
      %1652 = vmatpush2.msra.mxu0 0.0
      %1653 = vmatprep.subr.mxu0 0.0
      %1654 = vmatpush2.msra.mxu0 0.0
      %1655 = vmatprep.subr.mxu0 0.0
      %1656 = vmatpush2.msra.mxu0 0.0
      %1657 = vmatprep.subr.mxu0 0.0
      %1658 = vmatpush2.msra.mxu0 0.0
      %1659 = vmatprep.subr.mxu0 0.0
      %1660 = vmatpush2.msra.mxu0 0.0
      %1661 = vmatprep.subr.mxu0 0.0
      %1662 = vmatpush2.msra.mxu0 0.0
      %1663 = vmatprep.subr.mxu0 0.0
      %1664 = vmatpush2.msra.mxu0 0.0
      %1665 = vmatprep.subr.mxu0 0.0
      %1666 = vmatpush2.msra.mxu0 0.0
      %1667 = vmatprep.subr.mxu0 0.0
      %1668 = vmatpush2.msra.mxu0 0.0
      %1669 = vmatprep.subr.mxu0 0.0
      %1670 = vmatpush2.msra.mxu0 0.0
      %1671 = vmatprep.mubr.f32.mxu0 0.0
      %1672 = vmatmul.mubr.f32.gmra.mxu0 %v1605
      %v1673 = vpop.f32.mrf.mxu0
      %v1674 = vadd.f32 0.0, %v1673
      %v1675 = vpop.f32.mrf.mxu0
      %v1676 = vadd.f32 0.0, %v1675
      %1677 = vdwg.mxu0
      %v1678 = vadd.f32 %v1575, %v1674
      %v1679 = vadd.f32 %v1577, %v1676
      %v1680 = vld [vmem:[%s7] sm:$0xff]
      %1682 = vset.pattern.permute.xlu0 0
      %1683 = vperm.xlu0 %1682, %v1680
      %v1684 = vpop.permute.xlu0 %1683
      %v1686 = vadd.f32 %v1678, %v1684
      %v1687 = vadd.f32 %v1679, %v1684
      %1688 = vst [vmem:[%s325] sm:$0xff] %v1686
      %1689 = vst [vmem:[%s325 + $0x8] sm:$0xff] %v1687
      %p1690 = scmp.lt.s32.totalorder %s19, 1
      %s1691 = scalar_select %p1690, %s19, 1
      %s1692 = smul.addr %s1691, 2
      %s1693 = smul.addr %s1692, 8
      %s1694 = scalar_lea.vmem %s8, %s1693
      // Predicated region
      $region53: #{g2conv2d4_random_forward.1} parent=51 // pred_check
        %p1695 = pneg %p215
      $region54: #{g2conv2d4_random_forward.1} parent=51 // pred_check_branch
        %1697 = sbr.rel (%p1695) target = $region56
      $region55: #{g2conv2d4_random_forward.1} parent=51 // pred_region
        _
      $region56: #{g2conv2d4_random_forward.1} parent=51 // pred_fallthru
        _
    $region52: #{g2conv2d4_random_forward.1} parent=5 // pred_fallthru
      _
    %p1698 = scmp.le.s32.totalorder 2, %s14
    // Predicated region
    $region57: #{g2conv2d4_random_forward.1} parent=5 // pred_check
      %p1699 = pneg %p1698
    $region58: #{g2conv2d4_random_forward.1} parent=5 // pred_check_branch
      %1701 = sbr.rel (%p1699) target = $region60
    $region59: #{g2conv2d4_random_forward.1} parent=5 // pred_region
      %s1702 = ssub.s32 %s14, 2
      // Predicated region
      $region61: #{g2conv2d4_random_forward.1} parent=59 // pred_check
        %p1703 = pneg %p221
      $region62: #{g2conv2d4_random_forward.1} parent=59 // pred_check_branch
        %1705 = sbr.rel (%p1703) target = $region64
      $region63: #{g2conv2d4_random_forward.1} parent=59 // pred_region
        %p1706 = scmp.lt.s32.totalorder %s20, 1
        %s1707 = scalar_select %p1706, %s20, 1
        %s1708 = smul.addr %s1707, 2
        %s1709 = smul.addr %s1708, 8
        %s1710 = scalar_lea.vmem %s8, %s1709
      $region64: #{g2conv2d4_random_forward.1} parent=59 // pred_fallthru
        _
    $region60: #{g2conv2d4_random_forward.1} parent=5 // pred_fallthru
      _
  $region6: #{g2conv2d4_random_forward.1} parent=0 // loop_footer
    %s18 = sadd.s32 1, %s14
  $region7: #{g2conv2d4_random_forward.1} parent=0 // loop_footer_branch
    %13 = sbr.rel target = $region3
  $region8: #{g2conv2d4_random_forward.1} parent=0 // loop_exit
    _

</llo_original>
